<compile_context>
chip_gen: v7x
topology: tpu7x:2x2x1
jax: 0.10.0
libtpu: 0.0.40
codegen_flags: <defaults>
</compile_context>

<pallas_src>
import functools
import math

import jax
import jax.numpy as jnp
from jax.experimental import pallas as pl
from jax.experimental.pallas import tpu as pltpu

BN_EPS = 1e-3
ACT_DTYPE = jnp.bfloat16
VMEM_LIMIT = 64 * 1024 * 1024

CHANNELS = [24, 24, 48, 96, 96, 192]
REPEATS = [3, 4, 6, 5, 5]
KSIZES = [3, 3, 3, 3, 3]
STRIDES = [(1, 2, 2), (1, 2, 2), (1, 2, 2), (1, 1, 1), (2, 2, 2)]


def _round_up(n, m):
    return ((n + m - 1) // m) * m


def _pick_tile_n(N):
    # Large tiles amortize the ~0.35us/step grid overhead; keep >=2 grid steps
    # so the 'parallel' axis can shard across both TensorCores on v7x.
    if N <= 64:
        return _round_up(N, 8)
    return min(512, _round_up((N + 1) // 2, 8))


def _cparams(sem):
    return pltpu.CompilerParams(dimension_semantics=sem,
                                vmem_limit_bytes=VMEM_LIMIT)


# ---------------------------------------------------------------------------
# Pallas kernels
# ---------------------------------------------------------------------------

def _matmul_affine_kernel(x_ref, w_ref, s_ref, b_ref, o_ref, *, relu):
    acc = jnp.dot(x_ref[...], w_ref[...], preferred_element_type=jnp.float32)
    y = acc * s_ref[...] + b_ref[...]
    if relu:
        y = jnp.maximum(y, 0.0)
    o_ref[...] = y.astype(o_ref.dtype)


def matmul_affine(x, w, scale, bias, relu=False, out_dtype=ACT_DTYPE):
    """out = maybe_relu((x @ w) * scale + bias).  x:(N,K) w:(K,M) scale/bias:(M,)."""
    N, K = x.shape
    K2, M = w.shape
    assert K == K2
    tile_n = _pick_tile_n(N)
    n_pad = _round_up(N, tile_n)
    x_p = jnp.pad(x, ((0, n_pad - N), (0, 0)))
    out = pl.pallas_call(
        functools.partial(_matmul_affine_kernel, relu=relu),
        out_shape=jax.ShapeDtypeStruct((n_pad, M), out_dtype),
        grid_spec=pltpu.PrefetchScalarGridSpec(
            num_scalar_prefetch=0,
            grid=(n_pad // tile_n,),
            in_specs=[
                pl.BlockSpec((tile_n, K), lambda i: (i, 0)),
                pl.BlockSpec((K, M), lambda i: (0, 0)),
                pl.BlockSpec((1, M), lambda i: (0, 0)),
                pl.BlockSpec((1, M), lambda i: (0, 0)),
            ],
            out_specs=pl.BlockSpec((tile_n, M), lambda i: (i, 0)),
        ),
        compiler_params=_cparams(("parallel",)),
    )(x_p, w, scale.reshape(1, M), bias.reshape(1, M))
    return out[:N]


def _matmul_affine_concat_kernel(x_ref, w_ref, s_ref, b_ref, r_ref, o_ref):
    # projection + BN, with the dense-cat residual written into the same
    # (wider) output block -> no separate jnp.concatenate pass in HBM.
    M = w_ref.shape[1]
    acc = jnp.dot(x_ref[...], w_ref[...], preferred_element_type=jnp.float32)
    y = acc * s_ref[...] + b_ref[...]
    o_ref[:, :M] = y.astype(o_ref.dtype)
    o_ref[:, M:] = r_ref[...].astype(o_ref.dtype)


def matmul_affine_concat(x, w, scale, bias, residual):
    """out = concat([(x @ w) * scale + bias, residual], axis=-1), single kernel."""
    N, K = x.shape
    _, M = w.shape
    Cr = residual.shape[1]
    tile_n = _pick_tile_n(N)
    n_pad = _round_up(N, tile_n)
    x_p = jnp.pad(x, ((0, n_pad - N), (0, 0)))
    r_p = jnp.pad(residual, ((0, n_pad - N), (0, 0)))
    out = pl.pallas_call(
        _matmul_affine_concat_kernel,
        out_shape=jax.ShapeDtypeStruct((n_pad, M + Cr), ACT_DTYPE),
        grid_spec=pltpu.PrefetchScalarGridSpec(
            num_scalar_prefetch=0,
            grid=(n_pad // tile_n,),
            in_specs=[
                pl.BlockSpec((tile_n, K), lambda i: (i, 0)),
                pl.BlockSpec((K, M), lambda i: (0, 0)),
                pl.BlockSpec((1, M), lambda i: (0, 0)),
                pl.BlockSpec((1, M), lambda i: (0, 0)),
                pl.BlockSpec((tile_n, Cr), lambda i: (i, 0)),
            ],
            out_specs=pl.BlockSpec((tile_n, M + Cr), lambda i: (i, 0)),
        ),
        compiler_params=_cparams(("parallel",)),
    )(x_p, w, scale.reshape(1, M), bias.reshape(1, M), r_p)
    return out[:N]


def _dw3_s1_kernel(x0_ref, x1_ref, x2_ref, w_ref, s_ref, b_ref, o_ref):
    """3x3x3 depthwise conv (stride 1) + BN + ReLU for one (batch, out-depth)
    slice.  x*_ref are the three depth-shifted padded slices (Hp, Wp, C);
    the 9 H/W taps are static in-VMEM slices.  MAC in f32 (v5e VPU: no bf16)."""
    Ho, Wo, C = o_ref.shape
    acc = jnp.zeros((Ho, Wo, C), jnp.float32)
    t = 0
    for x_ref in (x0_ref, x1_ref, x2_ref):
        xa = x_ref[...].astype(jnp.float32)          # (Ho+2, Wo+2, C)
        for bh in range(3):
            for cw in range(3):
                acc = acc + xa[bh:bh + Ho, cw:cw + Wo, :] * w_ref[t]
                t += 1
    y = acc * s_ref[...] + b_ref[...]
    o_ref[...] = jnp.maximum(y, 0.0).astype(o_ref.dtype)


def depthwise3x3_s1_bn_relu(x, w_taps, scale, bias):
    """Stride-1 depthwise 3x3x3 (TF-SAME) + BN + ReLU without any im2col:
    the padded activation is kept once in HBM and read ~3x (one shifted view
    per depth tap) instead of the previous 27x-replicated patch tensor."""
    B, D, H, W, C = x.shape
    xp = jnp.pad(x, ((0, 0), (1, 1), (1, 1), (1, 1), (0, 0)))
    Hp, Wp = H + 2, W + 2
    w4 = w_taps.reshape(27, 1, 1, C).astype(jnp.float32)
    s3 = scale.reshape(1, 1, C)
    b3 = bias.reshape(1, 1, C)

    def x_spec(a):
        return pl.BlockSpec((None, None, Hp, Wp, C),
                            lambda b, d, a=a: (b, d + a, 0, 0, 0))

    return pl.pallas_call(
        _dw3_s1_kernel,
        out_shape=jax.ShapeDtypeStruct((B, D, H, W, C), ACT_DTYPE),
        grid_spec=pltpu.PrefetchScalarGridSpec(
            num_scalar_prefetch=0,
            grid=(B, D),
            in_specs=[
                x_spec(0), x_spec(1), x_spec(2),
                pl.BlockSpec((27, 1, 1, C), lambda b, d: (0, 0, 0, 0)),
                pl.BlockSpec((1, 1, C), lambda b, d: (0, 0, 0)),
                pl.BlockSpec((1, 1, C), lambda b, d: (0, 0, 0)),
            ],
            out_specs=pl.BlockSpec((None, None, H, W, C),
                                   lambda b, d: (b, d, 0, 0, 0)),
        ),
        compiler_params=_cparams(("parallel", "parallel")),
    )(xp, xp, xp, w4, s3, b3)


def _dw_patches_proj_kernel(p_ref, w_ref, s1_ref, b1_ref, pw_ref, s2_ref,
                            b2_ref, o_ref, *, taps):
    """Fused depthwise (over pre-extracted patches) + BN + ReLU + 1x1
    projection + BN.  Intermediate (tile_n, expc) never touches HBM."""
    acc = p_ref[0].astype(jnp.float32) * w_ref[0:1, :]
    for t in range(1, taps):
        acc = acc + p_ref[t].astype(jnp.float32) * w_ref[t:t + 1, :]
    y = jnp.maximum(acc * s1_ref[...] + b1_ref[...], 0.0)
    z = jnp.dot(y.astype(pw_ref.dtype), pw_ref[...],
                preferred_element_type=jnp.float32)
    z = z * s2_ref[...] + b2_ref[...]
    o_ref[...] = z.astype(o_ref.dtype)


def _gap_kernel(x_ref, o_ref, acc_ref, *, inv_s):
    @pl.when(pl.program_id(0) == 0)
    def _():
        acc_ref[...] = jnp.zeros_like(acc_ref)
    acc_ref[...] += jnp.sum(x_ref[...].astype(jnp.float32), axis=1)
    @pl.when(pl.program_id(0) == pl.num_programs(0) - 1)
    def _():
        o_ref[...] = acc_ref[...] * inv_s


def global_avgpool(x):
    """x:(B,S,C) -> (B,C) mean over S, tiled over S with an f32 accumulator."""
    B, S, C = x.shape
    tile_s = min(512, _round_up(S, 8))
    s_pad = _round_up(S, tile_s)
    x_p = jnp.pad(x, ((0, 0), (0, s_pad - S), (0, 0)))  # zero rows don't bias the sum
    return pl.pallas_call(
        functools.partial(_gap_kernel, inv_s=1.0 / float(S)),
        out_shape=jax.ShapeDtypeStruct((B, C), jnp.float32),
        grid_spec=pltpu.PrefetchScalarGridSpec(
            num_scalar_prefetch=0,
            grid=(s_pad // tile_s,),
            in_specs=[pl.BlockSpec((B, tile_s, C), lambda i: (0, i, 0))],
            out_specs=pl.BlockSpec((B, C), lambda i: (0, 0)),
            scratch_shapes=[pltpu.VMEM((B, C), jnp.float32)],
        ),
        compiler_params=_cparams(("arbitrary",)),
    )(x_p)


# ---------------------------------------------------------------------------
# Glue: TF-SAME padding, patch extraction, conv wrappers
# ---------------------------------------------------------------------------

def _same_pad_1d(L, k, s):
    out = -(-L // s)
    pad = max((out - 1) * s + k - L, 0)
    return pad // 2, pad - pad // 2, out


def _extract_patches(x, ksize, stride):
    """x:(B,D,H,W,C) -> list of kD*kH*kW shifted/strided views (B,Do,Ho,Wo,C)."""
    B, D, H, W, C = x.shape
    kd, kh, kw = ksize
    sd, sh, sw = stride
    pdl, pdr, Do = _same_pad_1d(D, kd, sd)
    phl, phr, Ho = _same_pad_1d(H, kh, sh)
    pwl, pwr, Wo = _same_pad_1d(W, kw, sw)
    xp = jnp.pad(x, ((0, 0), (pdl, pdr), (phl, phr), (pwl, pwr), (0, 0)))
    patches = []
    for a in range(kd):
        for b in range(kh):
            for c in range(kw):
                patches.append(
                    xp[:, a:a + sd * (Do - 1) + 1:sd,
                          b:b + sh * (Ho - 1) + 1:sh,
                          c:c + sw * (Wo - 1) + 1:sw, :])
    return patches, (Do, Ho, Wo)


def conv3d_same_matmul(x, w_mat, ksize, stride, scale, bias, relu):
    """Full 3-D conv (stem) via im2col + Pallas MXU matmul with fused BN(+ReLU)."""
    B = x.shape[0]
    patches, (Do, Ho, Wo) = _extract_patches(x, ksize, stride)
    cols = jnp.concatenate(patches, axis=-1).reshape(B * Do * Ho * Wo, -1)
    out = matmul_affine(cols, w_mat, scale, bias, relu=relu)
    return out.reshape(B, Do, Ho, Wo, -1)


def pointwise_conv3d(x, w, scale, bias, relu=False):
    B, D, H, W, C = x.shape
    out = matmul_affine(x.reshape(-1, C), w, scale, bias, relu=relu)
    return out.reshape(B, D, H, W, -1)


def dw_proj_im2col(x, dw_w, s1, b1, proj_w, s2, b2, ksize, stride):
    """Strided stage-entry block: im2col patches + ONE fused dw/BN/ReLU/proj/BN
    kernel (strided blocks have 4-8x smaller outputs, so im2col stays cheap)."""
    B = x.shape[0]
    C = x.shape[-1]
    patches, (Do, Ho, Wo) = _extract_patches(x, ksize, stride)
    T = len(patches)
    N = B * Do * Ho * Wo
    stacked = jnp.stack(patches, axis=0).reshape(T, N, C)
    M = proj_w.shape[1]
    tile_n = _pick_tile_n(N)
    n_pad = _round_up(N, tile_n)
    p = jnp.pad(stacked, ((0, 0), (0, n_pad - N), (0, 0)))
    out = pl.pallas_call(
        functools.partial(_dw_patches_proj_kernel, taps=T),
        out_shape=jax.ShapeDtypeStruct((n_pad, M), ACT_DTYPE),
        grid_spec=pltpu.PrefetchScalarGridSpec(
            num_scalar_prefetch=0,
            grid=(n_pad // tile_n,),
            in_specs=[
                pl.BlockSpec((T, tile_n, C), lambda i: (0, i, 0)),
                pl.BlockSpec((T, C), lambda i: (0, 0)),
                pl.BlockSpec((1, C), lambda i: (0, 0)),
                pl.BlockSpec((1, C), lambda i: (0, 0)),
                pl.BlockSpec((C, M), lambda i: (0, 0)),
                pl.BlockSpec((1, M), lambda i: (0, 0)),
                pl.BlockSpec((1, M), lambda i: (0, 0)),
            ],
            out_specs=pl.BlockSpec((tile_n, M), lambda i: (i, 0)),
        ),
        compiler_params=_cparams(("parallel",)),
    )(p, dw_w.astype(jnp.float32), s1.reshape(1, C), b1.reshape(1, C),
      proj_w, s2.reshape(1, M), b2.reshape(1, M))
    return out[:N].reshape(B, Do, Ho, Wo, M)


# ---------------------------------------------------------------------------
# Parameter construction (deterministic, synthetic)
# ---------------------------------------------------------------------------

def _bn_params(key, c):
    k1, k2 = jax.random.split(key)
    gamma = 1.0 + 0.1 * jax.random.normal(k1, (c,), jnp.float32)
    beta = 0.1 * jax.random.normal(k2, (c,), jnp.float32)
    # eval-mode BatchNorm3d with running_mean=0, running_var=1 folded to affine
    scale = gamma / jnp.sqrt(1.0 + BN_EPS)
    bias = beta
    return scale, bias


def build_block_configs():
    cfgs = []
    for idx in range(len(KSIZES)):
        cfgs.append(dict(inc=CHANNELS[idx], ouc=CHANNELS[idx + 1], expand=0,
                         k=KSIZES[idx], stride=STRIDES[idx]))
        for i in range(REPEATS[idx] - 1):
            cfgs.append(dict(inc=CHANNELS[idx + 1], ouc=CHANNELS[idx + 1],
                             expand=CHANNELS[idx + 1] * i, k=KSIZES[idx], stride=1))
    return cfgs


def init_params(key, num_classes):
    cfgs = build_block_configs()
    keys = iter(jax.random.split(key, 4 * len(cfgs) + 16))
    params = {}

    # stem: Fused_Transform3D(3, 24, kernel=(5,5,5), stride=(1,2,2), expand_ratio=1)
    cin, expc, ouc = 3, 24, 24
    kd = kh = kw = 5
    fan_in = cin * kd * kh * kw
    params['stem_fused_w'] = (jax.random.normal(next(keys), (kd * kh * kw * cin, expc),
                                                jnp.float32)
                              * math.sqrt(2.0 / fan_in)).astype(ACT_DTYPE)
    params['stem_bn1'] = _bn_params(next(keys), expc)
    params['stem_proj_w'] = (jax.random.normal(next(keys), (expc, ouc), jnp.float32)
                             * math.sqrt(2.0 / expc)).astype(ACT_DTYPE)
    params['stem_bn2'] = _bn_params(next(keys), ouc)
    params['stem_bn'] = _bn_params(next(keys), ouc)

    blocks = []
    for cfg in cfgs:
        expc = cfg['inc'] + cfg['expand']
        ouc = cfg['ouc']
        k = cfg['k']
        taps = k * k * k
        stride = cfg['stride'] if isinstance(cfg['stride'], tuple) else (1, 1, 1)
        blocks.append(dict(
            expc=expc,
            ouc=ouc,
            k=(k, k, k),
            stride=stride,
            cat=(cfg['stride'] == 1),   # torch: `if self.stride == 1` (tuple != 1)
            dw_w=(jax.random.normal(next(keys), (taps, expc), jnp.float32)
                  * math.sqrt(2.0 / taps)),
            bn1=_bn_params(next(keys), expc),
            proj_w=(jax.random.normal(next(keys), (expc, ouc), jnp.float32)
                    * math.sqrt(2.0 / expc)).astype(ACT_DTYPE),
            bn2=_bn_params(next(keys), ouc),
        ))
    params['blocks'] = blocks

    fc_in = CHANNELS[-1] * REPEATS[-1]   # 192 * 5 = 960 (matches final channel count)
    params['fc_w'] = (jax.random.normal(next(keys), (fc_in, num_classes), jnp.float32)
                      / math.sqrt(fc_in)).astype(ACT_DTYPE)
    params['fc_b'] = 0.01 * jax.random.normal(next(keys), (num_classes,), jnp.float32)
    params['fc_scale'] = jnp.ones((num_classes,), jnp.float32)
    return params


# ---------------------------------------------------------------------------
# DenseVireo forward
# ---------------------------------------------------------------------------

def dense_vireo_forward(x_ncdhw, params):
    # PyTorch NCDHW -> NDHWC, bf16 activations everywhere (f32 accumulation).
    x = jnp.transpose(x_ncdhw, (0, 2, 3, 4, 1)).astype(ACT_DTYPE)

    # ---- stem (Fused_Transform3D): conv5 + bn1 + relu ----
    s1, b1 = params['stem_bn1']
    x = conv3d_same_matmul(x, params['stem_fused_w'], (5, 5, 5), (1, 2, 2),
                           s1, b1, relu=True)
    # stem 1x1 projection with bn2 AND the network-level _stem_bn + ReLU folded in
    s2, b2 = params['stem_bn2']
    ss, sb = params['stem_bn']
    x = pointwise_conv3d(x, params['stem_proj_w'], s2 * ss, b2 * ss + sb, relu=True)
    # stem inc(3) != ouc(24) -> no residual
    # TODO(synk): Attention3d / SE block result is discarded in the reference
    # forward (`self._attention(x)` unassigned), so it is a no-op and omitted.

    # ---- Transform3D blocks ----
    for bp in params['blocks']:
        inputs = x
        expc = bp['expc']
        xin = inputs[..., :expc] if inputs.shape[-1] != expc else inputs
        s1, b1 = bp['bn1']
        s2, b2 = bp['bn2']
        if bp['stride'] == (1, 1, 1):
            y = depthwise3x3_s1_bn_relu(xin, bp['dw_w'], s1, b1)
            B, D, H, W, _ = y.shape
            y2 = y.reshape(B * D * H * W, expc)
            if bp['cat']:
                r = inputs.reshape(B * D * H * W, inputs.shape[-1])
                out = matmul_affine_concat(y2, bp['proj_w'], s2, b2, r)
            else:
                out = matmul_affine(y2, bp['proj_w'], s2, b2, relu=False)
            x = out.reshape(B, D, H, W, -1)
        else:
            # strided stage-entry block (never dense-cat in the reference model)
            x = dw_proj_im2col(xin, bp['dw_w'], s1, b1, bp['proj_w'], s2, b2,
                               bp['k'], bp['stride'])

    # ---- head ----
    B, D, H, W, C = x.shape
    pooled = global_avgpool(x.reshape(B, D * H * W, C))
    # nn.Dropout(0.2): identity at inference (eval mode)
    logits = matmul_affine(pooled.astype(ACT_DTYPE), params['fc_w'],
                           params['fc_scale'], params['fc_b'],
                           relu=False, out_dtype=jnp.float32)
    return logits


if __name__ == "__main__":
    num_classes = 10
    key = jax.random.PRNGKey(0)
    pkey, xkey = jax.random.split(key)
    params = init_params(pkey, num_classes)
    # PyTorch-style input: (B, C, D, H, W)
    x = jax.random.normal(xkey, (2, 3, 8, 16, 16), jnp.float32)
    out = dense_vireo_forward(x, params)
    out = jax.block_until_ready(out)
    assert out.shape == (2, num_classes), out.shape
    assert bool(jnp.all(jnp.isfinite(out)))
    print("KERNEL_OK")
</pallas_src>

<mosaic_0001>
module attributes {stable_mosaic.version = 11 : i64} {
  func.func @_matmul_affine_kernel(%arg0: i32, %arg1: memref<512x375xbf16, #tpu.memory_space<vmem>>, %arg2: memref<375x24xbf16, #tpu.memory_space<vmem>>, %arg3: memref<1x24xf32, #tpu.memory_space<vmem>>, %arg4: memref<1x24xf32, #tpu.memory_space<vmem>>, %arg5: memref<512x24xbf16, #tpu.memory_space<vmem>>) attributes {dimension_semantics = [#tpu.dimension_semantics<parallel>], iteration_bounds = array<i64: 2>, scalar_prefetch = 0 : i64, scratch_operands = 0 : i64, tpu.core_type = #tpu.core_type<tc>, window_params = [{transform_indices = @transform_0, window_bounds = array<i64: 512, 375>}, {pipeline_mode = #tpu.pipeline_mode<synchronous>, transform_indices = @transform_1, window_bounds = array<i64: 375, 24>}, {pipeline_mode = #tpu.pipeline_mode<synchronous>, transform_indices = @transform_2, window_bounds = array<i64: 1, 24>}, {pipeline_mode = #tpu.pipeline_mode<synchronous>, transform_indices = @transform_3, window_bounds = array<i64: 1, 24>}, {transform_indices = @transform_4, window_bounds = array<i64: 512, 24>}]} {
    %c0 = arith.constant 0 : index
    %c0_0 = arith.constant 0 : index
    %0 = vector.load %arg1[%c0, %c0_0] : memref<512x375xbf16, #tpu.memory_space<vmem>>, vector<512x375xbf16>
    %c0_1 = arith.constant 0 : index
    %c0_2 = arith.constant 0 : index
    %1 = vector.load %arg2[%c0_1, %c0_2] : memref<375x24xbf16, #tpu.memory_space<vmem>>, vector<375x24xbf16>
    %cst = arith.constant dense<0.000000e+00> : vector<512x24xf32>
    %2 = tpu.matmul %0, %1, %cst {dimension_numbers = #tpu.dot_dimension_numbers<[1], [0], [0], [1], [0, 0, 1, 1], [], []>} : vector<512x375xbf16>, vector<375x24xbf16>, vector<512x24xf32> -> vector<512x24xf32>
    %c0_3 = arith.constant 0 : index
    %c0_4 = arith.constant 0 : index
    %3 = vector.load %arg3[%c0_3, %c0_4] : memref<1x24xf32, #tpu.memory_space<vmem>>, vector<1x24xf32>
    %4 = vector.broadcast %3 : vector<1x24xf32> to vector<512x24xf32>
    %5 = arith.mulf %2, %4 : vector<512x24xf32>
    %c0_5 = arith.constant 0 : index
    %c0_6 = arith.constant 0 : index
    %6 = vector.load %arg4[%c0_5, %c0_6] : memref<1x24xf32, #tpu.memory_space<vmem>>, vector<1x24xf32>
    %7 = vector.broadcast %6 : vector<1x24xf32> to vector<512x24xf32>
    %8 = arith.addf %5, %7 : vector<512x24xf32>
    %cst_7 = arith.constant 0.000000e+00 : f32
    %9 = vector.broadcast %cst_7 : f32 to vector<512x24xf32>
    %10 = arith.maximumf %8, %9 : vector<512x24xf32>
    %11 = arith.truncf %10 : vector<512x24xf32> to vector<512x24xbf16>
    %c0_8 = arith.constant 0 : index
    %c0_9 = arith.constant 0 : index
    %12 = vector.load %arg5[%c0_8, %c0_9] : memref<512x24xbf16, #tpu.memory_space<vmem>>, vector<512x24xbf16>
    tpu.vector_store %arg5[%c0_8, %c0_9], %11 {strides = array<i32>} : memref<512x24xbf16, #tpu.memory_space<vmem>>, vector<512x24xbf16>,
    return
  }
  func.func @transform_0(%arg0: i32) -> (i32, i32) {
    %c0_i32 = arith.constant 0 : i32
    %c0_i32_0 = arith.constant 0 : i32
    return %arg0, %c0_i32 : i32, i32
  }
  func.func @transform_1(%arg0: i32) -> (i32, i32) {
    %c0_i32 = arith.constant 0 : i32
    %c0_i32_0 = arith.constant 0 : i32
    %c0_i32_1 = arith.constant 0 : i32
    return %c0_i32, %c0_i32_0 : i32, i32
  }
  func.func @transform_2(%arg0: i32) -> (i32, i32) {
    %c0_i32 = arith.constant 0 : i32
    %c0_i32_0 = arith.constant 0 : i32
    %c0_i32_1 = arith.constant 0 : i32
    return %c0_i32, %c0_i32_0 : i32, i32
  }
  func.func @transform_3(%arg0: i32) -> (i32, i32) {
    %c0_i32 = arith.constant 0 : i32
    %c0_i32_0 = arith.constant 0 : i32
    %c0_i32_1 = arith.constant 0 : i32
    return %c0_i32, %c0_i32_0 : i32, i32
  }
  func.func @transform_4(%arg0: i32) -> (i32, i32) {
    %c0_i32 = arith.constant 0 : i32
    %c0_i32_0 = arith.constant 0 : i32
    return %arg0, %c0_i32 : i32, i32
  }
}

</mosaic_0001>

<llo_original>
// kernel: tpu_custom_call.1
$region0: #{tpu_custom_call.1}
  #allocation0 [shape = 'u32[]', space=smem, size = 0x4, offset = 0x4, fixed_abs, tag = 'smem constant byte address 0x4 - core index']
  #allocation1 [shape = 'u32[144,128]{1,0:T(1,128)}', space=vmem, size = 0x12000, scoped, tag = 'internal scratch']
  %s0 = inlined_call_operand.hbm [shape: bf16[1024,375], index: 0, kind: input, shape index: {}]
  %s1 = inlined_call_operand.hbm [shape: bf16[375,24], index: 1, kind: input, shape index: {}]
  %s2 = inlined_call_operand.hbm [shape: f32[1,24], index: 2, kind: input, shape index: {}]
  %s3 = inlined_call_operand.hbm [shape: f32[1,24], index: 3, kind: input, shape index: {}]
  %s4 = inlined_call_operand.hbm [shape: bf16[1024,24], index: 4, kind: output, shape index: {}]
  %s5 = sld [smem:[#allocation0]]
  $region65: #{tpu_custom_call.1} parent=0
    _
  %s7 = ssub.s32 1, %s5
  %s8 = scalar_select 0, %s7, %s5
  $region1: #{tpu_custom_call.1} parent=0
    #allocation2 [shape = 'u8[786432]{0}', space=vmem, size = 0xc0000, scoped, tag = 'input window, operand 0']
    #allocation3 [shape = 's32[2]{0}', space=sflag, size = 0x8, scoped, tag = 'scoped memory for tpu_custom_call.1']
    #allocation4 [shape = 's32[2]{0}', space=sflag, size = 0x8, scoped, tag = 'scoped memory for tpu_custom_call.1']
    #allocation5 [shape = 'u8[96256]{0}', space=vmem, size = 0x17800, scoped, tag = 'input window, operand 1, single buffered']
    #allocation6 [shape = 's32[1]{0}', space=sflag, size = 0x4, scoped, tag = 'scoped memory for tpu_custom_call.1']
    #allocation7 [shape = 'u8[512]{0}', space=vmem, size = 0x400, scoped, tag = 'input window, operand 2, single buffered']
    #allocation8 [shape = 'u8[512]{0}', space=vmem, size = 0x400, scoped, tag = 'input window, operand 3, single buffered']
    #allocation9 [shape = 's32[1]{0}', space=sflag, size = 0x4, scoped, tag = 'scoped memory for tpu_custom_call.1']
    #allocation10 [shape = 'u8[262144]{0}', space=vmem, size = 0x40000, scoped, tag = 'output window, operand 0']
    %9 = vsyncpa [#allocation3], 0
    %s10 = scalar_lea.sflag [#allocation3], 1
    %11 = vsyncpa %s10, 0
    %12 = vsyncpa [#allocation6], 0
    %13 = vsyncpa [#allocation9], 0
    %14 = vsyncpa [#allocation4], 0
    %s15 = scalar_lea.sflag [#allocation4], 1
    %16 = vsyncpa %s15, 0
    loop: start=0, step=1, limit=4
    $region2: #{tpu_custom_call.1} parent=1 // loop_pre_header
      _
    $region3: #{tpu_custom_call.1} parent=1 // loop_header
      %s18 = sphi 0, %s22
      %p19 = scmp.ge.s32.totalorder %s18, 4
      %s28 = sphi 0, %s30
      %s31 = sphi 0, %s28
      %s32 = sphi 0, %s31
      %s48 = sphi 0, %s32
      %s52 = sphi 0, %s52
      %s54 = sphi 0, %s52
      %s55 = sphi 0, %s54
      %s69 = sphi 0, %s55
      %s73 = sphi 0, %s73
      %s75 = sphi 0, %s73
      %s76 = sphi 0, %s75
      %s90 = sphi 0, %s76
      %s94 = sphi 0, %s94
      %s96 = sphi 0, %s94
      %s97 = sphi 0, %s96
      %s111 = sphi 0, %s97
      %s117 = sphi 0, %s119
      %s120 = sphi 0, %s117
      %s121 = sphi 0, %s120
      %s137 = sphi 0, %s121
    $region4: #{tpu_custom_call.1} parent=1 // loop_header_branch
      %21 = sbr.rel (%p19) target = $region8
    $region5: #{tpu_custom_call.1} parent=1 // loop_body
      %s23 = ssub.s32 %s18, 1
      %s24 = ssub.s32 %s18, 2
      %s25 = sadd.s32 %s18, 1
      %s26 = ssub.s32 %s18, %s25
      %p27 = scmp.eq.s32.totalorder %s26, 0
      %s29 = sadd.s32 %s28, 1
      %s30 = scalar_select %p27, %s28, %s29
      %p33 = pneg %p27
      %p34 = scmp.eq.s32.totalorder %s18, 1
      %p35 = por %p33, %p34
      %p36 = scmp.ne.s32.totalorder %s28, %s31
      %p37 = scmp.eq.s32.totalorder %s18, 0
      %p38 = por %p36, %p37
      %p39 = scmp.ne.s32.totalorder %s28, %s31
      %p40 = scmp.eq.s32.totalorder %s23, 1
      %p41 = por %p39, %p40
      %p42 = scmp.ne.s32.totalorder %s31, %s32
      %p43 = scmp.eq.s32.totalorder %s23, 0
      %p44 = por %p42, %p43
      %p45 = scmp.ne.s32.totalorder %s31, %s32
      %p46 = scmp.eq.s32.totalorder %s24, 1
      %p47 = por %p45, %p46
      %p49 = scmp.ne.s32.totalorder %s32, %s48
      %p50 = scmp.eq.s32.totalorder %s24, 0
      %p51 = por %p49, %p50
      %s53 = sadd.s32 %s52, 1
      %p56 = scmp.eq.s32.totalorder %s18, 1
      %p57 = scmp.ne.s32.totalorder %s52, %s54
      %p58 = scmp.eq.s32.totalorder %s18, 0
      %p59 = por %p57, %p58
      %p60 = scmp.ne.s32.totalorder %s52, %s54
      %p61 = scmp.eq.s32.totalorder %s23, 1
      %p62 = por %p60, %p61
      %p63 = scmp.ne.s32.totalorder %s54, %s55
      %p64 = scmp.eq.s32.totalorder %s23, 0
      %p65 = por %p63, %p64
      %p66 = scmp.ne.s32.totalorder %s54, %s55
      %p67 = scmp.eq.s32.totalorder %s24, 1
      %p68 = por %p66, %p67
      %p70 = scmp.ne.s32.totalorder %s55, %s69
      %p71 = scmp.eq.s32.totalorder %s24, 0
      %p72 = por %p70, %p71
      %s74 = sadd.s32 %s73, 1
      %p77 = scmp.eq.s32.totalorder %s18, 1
      %p78 = scmp.ne.s32.totalorder %s73, %s75
      %p79 = scmp.eq.s32.totalorder %s18, 0
      %p80 = por %p78, %p79
      %p81 = scmp.ne.s32.totalorder %s73, %s75
      %p82 = scmp.eq.s32.totalorder %s23, 1
      %p83 = por %p81, %p82
      %p84 = scmp.ne.s32.totalorder %s75, %s76
      %p85 = scmp.eq.s32.totalorder %s23, 0
      %p86 = por %p84, %p85
      %p87 = scmp.ne.s32.totalorder %s75, %s76
      %p88 = scmp.eq.s32.totalorder %s24, 1
      %p89 = por %p87, %p88
      %p91 = scmp.ne.s32.totalorder %s76, %s90
      %p92 = scmp.eq.s32.totalorder %s24, 0
      %p93 = por %p91, %p92
      %s95 = sadd.s32 %s94, 1
      %p98 = scmp.eq.s32.totalorder %s18, 1
      %p99 = scmp.ne.s32.totalorder %s94, %s96
      %p100 = scmp.eq.s32.totalorder %s18, 0
      %p101 = por %p99, %p100
      %p102 = scmp.ne.s32.totalorder %s94, %s96
      %p103 = scmp.eq.s32.totalorder %s23, 1
      %p104 = por %p102, %p103
      %p105 = scmp.ne.s32.totalorder %s96, %s97
      %p106 = scmp.eq.s32.totalorder %s23, 0
      %p107 = por %p105, %p106
      %p108 = scmp.ne.s32.totalorder %s96, %s97
      %p109 = scmp.eq.s32.totalorder %s24, 1
      %p110 = por %p108, %p109
      %p112 = scmp.ne.s32.totalorder %s97, %s111
      %p113 = scmp.eq.s32.totalorder %s24, 0
      %p114 = por %p112, %p113
      %s115 = ssub.s32 %s18, %s25
      %p116 = scmp.eq.s32.totalorder %s115, 0
      %s118 = sadd.s32 %s117, 1
      %s119 = scalar_select %p116, %s117, %s118
      %p122 = pneg %p116
      %p123 = scmp.eq.s32.totalorder %s18, 1
      %p124 = por %p122, %p123
      %p125 = scmp.ne.s32.totalorder %s117, %s120
      %p126 = scmp.eq.s32.totalorder %s18, 0
      %p127 = por %p125, %p126
      %p128 = scmp.ne.s32.totalorder %s117, %s120
      %p129 = scmp.eq.s32.totalorder %s23, 1
      %p130 = por %p128, %p129
      %p131 = scmp.ne.s32.totalorder %s120, %s121
      %p132 = scmp.eq.s32.totalorder %s23, 0
      %p133 = por %p131, %p132
      %p134 = scmp.ne.s32.totalorder %s120, %s121
      %p135 = scmp.eq.s32.totalorder %s24, 1
      %p136 = por %p134, %p135
      %p138 = scmp.ne.s32.totalorder %s121, %s137
      %p139 = scmp.eq.s32.totalorder %s24, 0
      %p140 = por %p138, %p139
      %p141 = scmp.le.s32.totalorder 1, %s18
      %p142 = scmp.lt.s32.totalorder %s18, 3
      %p143 = pnand %p141, %p142
      %p144 = pneg %p143
      // Predicated region
      $region9: #{tpu_custom_call.1} parent=5 // pred_check
        _
      $region10: #{tpu_custom_call.1} parent=5 // pred_check_branch
        %146 = sbr.rel (%p143) target = $region12
      $region11: #{tpu_custom_call.1} parent=5 // pred_region
        %s147 = ssub.s32 %s18, 1
        // Predicated region
        $region13: #{tpu_custom_call.1} parent=11 // pred_check
          %p148 = pneg %p65
        $region14: #{tpu_custom_call.1} parent=11 // pred_check_branch
          %150 = sbr.rel (%p148) target = $region16
        $region15: #{tpu_custom_call.1} parent=11 // pred_region
          %s152 = ssub.s32 3008, 3008
          %153 = vsyncadd [#allocation6], %s152
          %s154 = sshll.u32 [#allocation5], 4
          %s155 = int_to_ptr.vmem [resolvable:$true] %s154
          %160 = dma.hbm_to_vmem [thread:$0]  %s1, 3008, %s155, [#allocation6], 64, 64, 4
        $region16: #{tpu_custom_call.1} parent=11 // pred_fallthru
          _
        // Predicated region
        $region17: #{tpu_custom_call.1} parent=11 // pred_check
          %p161 = pneg %p86
        $region18: #{tpu_custom_call.1} parent=11 // pred_check_branch
          %163 = sbr.rel (%p161) target = $region20
        $region19: #{tpu_custom_call.1} parent=11 // pred_region
          %s165 = ssub.s32 16, 16
          %166 = vsyncadd [#allocation6], %s165
          %s168 = sshll.u32 [#allocation7], 4
          %s169 = int_to_ptr.vmem [resolvable:$true] %s168
          %171 = dma.hbm_to_vmem [thread:$0]  %s2, 16, %s169, [#allocation6]
        $region20: #{tpu_custom_call.1} parent=11 // pred_fallthru
          _
        // Predicated region
        $region21: #{tpu_custom_call.1} parent=11 // pred_check
          %p172 = pneg %p107
        $region22: #{tpu_custom_call.1} parent=11 // pred_check_branch
          %174 = sbr.rel (%p172) target = $region24
        $region23: #{tpu_custom_call.1} parent=11 // pred_region
          %s176 = ssub.s32 16, 16
          %177 = vsyncadd [#allocation9], %s176
          %s179 = sshll.u32 [#allocation8], 4
          %s180 = int_to_ptr.vmem [resolvable:$true] %s179
          %182 = dma.hbm_to_vmem [thread:$0]  %s3, 16, %s180, [#allocation9]
        $region24: #{tpu_custom_call.1} parent=11 // pred_fallthru
          _
      $region12: #{tpu_custom_call.1} parent=5 // pred_fallthru
        _
      %p183 = scmp.lt.s32.totalorder %s18, 2
      // Predicated region
      $region25: #{tpu_custom_call.1} parent=5 // pred_check
        %p184 = pneg %p183
      $region26: #{tpu_custom_call.1} parent=5 // pred_check_branch
        %186 = sbr.rel (%p184) target = $region28
      $region27: #{tpu_custom_call.1} parent=5 // pred_region
        // Predicated region
        $region29: #{tpu_custom_call.1} parent=27 // pred_check
          %p187 = pneg %p38
        $region30: #{tpu_custom_call.1} parent=27 // pred_check_branch
          %189 = sbr.rel (%p187) target = $region32
        $region31: #{tpu_custom_call.1} parent=27 // pred_region
          %s190 = sand.u32 %s28, 1
          %s191 = scalar_lea.sflag [#allocation3], %s190
          %s192 = sand.u32 %s28, 1
          %s193 = smul.addr %s192, 768
          %s194 = scalar_lea.vmem [#allocation2], %s193
          %s195 = smul.u32 64, %s18
          %s197 = ssub.s32 12288, 12288
          %198 = vsyncadd %s191, %s197
          %s199 = smul.addr %s195, 3
          %s200 = smul.addr %s199, 64
          %s201 = scalar_lea.hbm %s0, %s200
          %s202 = sshll.u32 %s194, 4
          %s203 = int_to_ptr.vmem [resolvable:$true] %s202
          %208 = dma.hbm_to_vmem [thread:$0]  %s201, 12288, %s203, %s191, 192, 192, 12
        $region32: #{tpu_custom_call.1} parent=27 // pred_fallthru
          _
      $region28: #{tpu_custom_call.1} parent=5 // pred_fallthru
        _
      %p209 = scmp.le.s32.totalorder 1, %s18
      %p210 = scmp.lt.s32.totalorder %s18, 3
      %p211 = pnand %p209, %p210
      %p212 = pneg %p211
      // Predicated region
      $region33: #{tpu_custom_call.1} parent=5 // pred_check
        _
      $region34: #{tpu_custom_call.1} parent=5 // pred_check_branch
        %214 = sbr.rel (%p211) target = $region36
      $region35: #{tpu_custom_call.1} parent=5 // pred_region
        %s215 = ssub.s32 %s18, 1
        %s216 = sand.u32 %s31, 1
        %s217 = scalar_lea.sflag [#allocation3], %s216
        %s218 = sand.u32 %s31, 1
        %s219 = smul.addr %s218, 768
        %s220 = scalar_lea.vmem [#allocation2], %s219
        // Predicated region
        $region37: #{tpu_custom_call.1} parent=35 // pred_check
          %p221 = pneg %p44
        $region38: #{tpu_custom_call.1} parent=35 // pred_check_branch
          %223 = sbr.rel (%p221) target = $region40
        $region39: #{tpu_custom_call.1} parent=35 // pred_region
          %224 = dma.done %s217, 12288
        $region40: #{tpu_custom_call.1} parent=35 // pred_fallthru
          _
        // Predicated region
        $region41: #{tpu_custom_call.1} parent=35 // pred_check
          %p225 = pneg %p65
        $region42: #{tpu_custom_call.1} parent=35 // pred_check_branch
          %227 = sbr.rel (%p225) target = $region44
        $region43: #{tpu_custom_call.1} parent=35 // pred_region
          %228 = dma.done [#allocation6], 3008
        $region44: #{tpu_custom_call.1} parent=35 // pred_fallthru
          _
        // Predicated region
        $region45: #{tpu_custom_call.1} parent=35 // pred_check
          %p229 = pneg %p86
        $region46: #{tpu_custom_call.1} parent=35 // pred_check_branch
          %231 = sbr.rel (%p229) target = $region48
        $region47: #{tpu_custom_call.1} parent=35 // pred_region
          %232 = dma.done [#allocation6], 16
        $region48: #{tpu_custom_call.1} parent=35 // pred_fallthru
          _
        // Predicated region
        $region49: #{tpu_custom_call.1} parent=35 // pred_check
          %p233 = pneg %p107
        $region50: #{tpu_custom_call.1} parent=35 // pred_check_branch
          %235 = sbr.rel (%p233) target = $region52
        $region51: #{tpu_custom_call.1} parent=35 // pred_region
          %236 = dma.done [#allocation9], 16
        $region52: #{tpu_custom_call.1} parent=35 // pred_fallthru
          _
        %s237 = sand.u32 %s31, 1
        %s238 = scalar_lea.sflag [#allocation3], %s237
        %s239 = sand.u32 %s31, 1
        %s240 = smul.addr %s239, 768
        %s241 = scalar_lea.vmem [#allocation2], %s240
        %p242 = pneg %p44
        %p243 = pneg %p41
        %p244 = pneg %p65
        %p245 = pneg %p62
        %p246 = pneg %p86
        %p247 = pneg %p83
        %p248 = pneg %p107
        %p249 = pneg %p104
        %p250 = pneg %p133
        %p251 = pneg %p130
        %s252 = sand.u32 %s120, 1
        %s253 = scalar_lea.sflag [#allocation4], %s252
        %s254 = sand.u32 %s120, 1
        %s255 = smul.addr %s254, 256
        %s256 = scalar_lea.vmem [#allocation10], %s255
        %s257 = smul.u32 64, %s23
        %s258 = smul.u32 64, %s23
        %v260 = vld [vmem:[%s220] sm:$0xff]
        %v261 = vld [vmem:[%s220 + $0x8] sm:$0xf]
        %v262 = vld [vmem:[%s220 + $0xc] sm:$0xff]
        %v263 = vld [vmem:[%s220 + $0x14] sm:$0xf]
        %v264 = vld [vmem:[%s220 + $0x18] sm:$0xff]
        %v265 = vld [vmem:[%s220 + $0x20] sm:$0xf]
        %v266 = vld [vmem:[%s220 + $0x24] sm:$0xff]
        %v267 = vld [vmem:[%s220 + $0x2c] sm:$0xf]
        %v268 = vld [vmem:[%s220 + $0x30] sm:$0xff]
        %v269 = vld [vmem:[%s220 + $0x38] sm:$0xf]
        %v270 = vld [vmem:[%s220 + $0x3c] sm:$0xff]
        %v271 = vld [vmem:[%s220 + $0x44] sm:$0xf]
        %v272 = vld [vmem:[%s220 + $0x48] sm:$0xff]
        %v273 = vld [vmem:[%s220 + $0x50] sm:$0xf]
        %v274 = vld [vmem:[%s220 + $0x54] sm:$0xff]
        %v275 = vld [vmem:[%s220 + $0x5c] sm:$0xf]
        %v276 = vld [vmem:[%s220 + $0x60] sm:$0xff]
        %v277 = vld [vmem:[%s220 + $0x68] sm:$0xf]
        %v278 = vld [vmem:[%s220 + $0x6c] sm:$0xff]
        %v279 = vld [vmem:[%s220 + $0x74] sm:$0xf]
        %v280 = vld [vmem:[%s220 + $0x78] sm:$0xff]
        %v281 = vld [vmem:[%s220 + $0x80] sm:$0xf]
        %v282 = vld [vmem:[%s220 + $0x84] sm:$0xff]
        %v283 = vld [vmem:[%s220 + $0x8c] sm:$0xf]
        %v284 = vld [vmem:[%s220 + $0x90] sm:$0xff]
        %v285 = vld [vmem:[%s220 + $0x98] sm:$0xf]
        %v286 = vld [vmem:[%s220 + $0x9c] sm:$0xff]
        %v287 = vld [vmem:[%s220 + $0xa4] sm:$0xf]
        %v288 = vld [vmem:[%s220 + $0xa8] sm:$0xff]
        %v289 = vld [vmem:[%s220 + $0xb0] sm:$0xf]
        %v290 = vld [vmem:[%s220 + $0xb4] sm:$0xff]
        %v291 = vld [vmem:[%s220 + $0xbc] sm:$0xf]
        %v292 = vld [vmem:[%s220 + $0xc0] sm:$0xff]
        %v293 = vld [vmem:[%s220 + $0xc8] sm:$0xf]
        %v294 = vld [vmem:[%s220 + $0xcc] sm:$0xff]
        %v295 = vld [vmem:[%s220 + $0xd4] sm:$0xf]
        %v296 = vld [vmem:[%s220 + $0xd8] sm:$0xff]
        %v297 = vld [vmem:[%s220 + $0xe0] sm:$0xf]
        %v298 = vld [vmem:[%s220 + $0xe4] sm:$0xff]
        %v299 = vld [vmem:[%s220 + $0xec] sm:$0xf]
        %v300 = vld [vmem:[%s220 + $0xf0] sm:$0xff]
        %v301 = vld [vmem:[%s220 + $0xf8] sm:$0xf]
        %v302 = vld [vmem:[%s220 + $0xfc] sm:$0xff]
        %v303 = vld [vmem:[%s220 + $0x104] sm:$0xf]
        %v304 = vld [vmem:[%s220 + $0x108] sm:$0xff]
        %v305 = vld [vmem:[%s220 + $0x110] sm:$0xf]
        %v306 = vld [vmem:[%s220 + $0x114] sm:$0xff]
        %v307 = vld [vmem:[%s220 + $0x11c] sm:$0xf]
        %v308 = vld [vmem:[%s220 + $0x120] sm:$0xff]
        %v309 = vld [vmem:[%s220 + $0x128] sm:$0xf]
        %v310 = vld [vmem:[%s220 + $0x12c] sm:$0xff]
        %v311 = vld [vmem:[%s220 + $0x134] sm:$0xf]
        %v312 = vld [vmem:[%s220 + $0x138] sm:$0xff]
        %v313 = vld [vmem:[%s220 + $0x140] sm:$0xf]
        %v314 = vld [vmem:[%s220 + $0x144] sm:$0xff]
        %v315 = vld [vmem:[%s220 + $0x14c] sm:$0xf]
        %v316 = vld [vmem:[%s220 + $0x150] sm:$0xff]
        %v317 = vld [vmem:[%s220 + $0x158] sm:$0xf]
        %v318 = vld [vmem:[%s220 + $0x15c] sm:$0xff]
        %v319 = vld [vmem:[%s220 + $0x164] sm:$0xf]
        %v320 = vld [vmem:[%s220 + $0x168] sm:$0xff]
        %v321 = vld [vmem:[%s220 + $0x170] sm:$0xf]
        %v322 = vld [vmem:[%s220 + $0x174] sm:$0xff]
        %v323 = vld [vmem:[%s220 + $0x17c] sm:$0xf]
        %v324 = vld [vmem:[%s220 + $0x180] sm:$0xff]
        %v325 = vld [vmem:[%s220 + $0x188] sm:$0xf]
        %v326 = vld [vmem:[%s220 + $0x18c] sm:$0xff]
        %v327 = vld [vmem:[%s220 + $0x194] sm:$0xf]
        %v328 = vld [vmem:[%s220 + $0x198] sm:$0xff]
        %v329 = vld [vmem:[%s220 + $0x1a0] sm:$0xf]
        %v330 = vld [vmem:[%s220 + $0x1a4] sm:$0xff]
        %v331 = vld [vmem:[%s220 + $0x1ac] sm:$0xf]
        %v332 = vld [vmem:[%s220 + $0x1b0] sm:$0xff]
        %v333 = vld [vmem:[%s220 + $0x1b8] sm:$0xf]
        %v334 = vld [vmem:[%s220 + $0x1bc] sm:$0xff]
        %v335 = vld [vmem:[%s220 + $0x1c4] sm:$0xf]
        %v336 = vld [vmem:[%s220 + $0x1c8] sm:$0xff]
        %v337 = vld [vmem:[%s220 + $0x1d0] sm:$0xf]
        %v338 = vld [vmem:[%s220 + $0x1d4] sm:$0xff]
        %v339 = vld [vmem:[%s220 + $0x1dc] sm:$0xf]
        %v340 = vld [vmem:[%s220 + $0x1e0] sm:$0xff]
        %v341 = vld [vmem:[%s220 + $0x1e8] sm:$0xf]
        %v342 = vld [vmem:[%s220 + $0x1ec] sm:$0xff]
        %v343 = vld [vmem:[%s220 + $0x1f4] sm:$0xf]
        %v344 = vld [vmem:[%s220 + $0x1f8] sm:$0xff]
        %v345 = vld [vmem:[%s220 + $0x200] sm:$0xf]
        %v346 = vld [vmem:[%s220 + $0x204] sm:$0xff]
        %v347 = vld [vmem:[%s220 + $0x20c] sm:$0xf]
        %v348 = vld [vmem:[%s220 + $0x210] sm:$0xff]
        %v349 = vld [vmem:[%s220 + $0x218] sm:$0xf]
        %v350 = vld [vmem:[%s220 + $0x21c] sm:$0xff]
        %v351 = vld [vmem:[%s220 + $0x224] sm:$0xf]
        %v352 = vld [vmem:[%s220 + $0x228] sm:$0xff]
        %v353 = vld [vmem:[%s220 + $0x230] sm:$0xf]
        %v354 = vld [vmem:[%s220 + $0x234] sm:$0xff]
        %v355 = vld [vmem:[%s220 + $0x23c] sm:$0xf]
        %v356 = vld [vmem:[%s220 + $0x240] sm:$0xff]
        %v357 = vld [vmem:[%s220 + $0x248] sm:$0xf]
        %v358 = vld [vmem:[%s220 + $0x24c] sm:$0xff]
        %v359 = vld [vmem:[%s220 + $0x254] sm:$0xf]
        %v360 = vld [vmem:[%s220 + $0x258] sm:$0xff]
        %v361 = vld [vmem:[%s220 + $0x260] sm:$0xf]
        %v362 = vld [vmem:[%s220 + $0x264] sm:$0xff]
        %v363 = vld [vmem:[%s220 + $0x26c] sm:$0xf]
        %v364 = vld [vmem:[%s220 + $0x270] sm:$0xff]
        %v365 = vld [vmem:[%s220 + $0x278] sm:$0xf]
        %v366 = vld [vmem:[%s220 + $0x27c] sm:$0xff]
        %v367 = vld [vmem:[%s220 + $0x284] sm:$0xf]
        %v368 = vld [vmem:[%s220 + $0x288] sm:$0xff]
        %v369 = vld [vmem:[%s220 + $0x290] sm:$0xf]
        %v370 = vld [vmem:[%s220 + $0x294] sm:$0xff]
        %v371 = vld [vmem:[%s220 + $0x29c] sm:$0xf]
        %v372 = vld [vmem:[%s220 + $0x2a0] sm:$0xff]
        %v373 = vld [vmem:[%s220 + $0x2a8] sm:$0xf]
        %v374 = vld [vmem:[%s220 + $0x2ac] sm:$0xff]
        %v375 = vld [vmem:[%s220 + $0x2b4] sm:$0xf]
        %v376 = vld [vmem:[%s220 + $0x2b8] sm:$0xff]
        %v377 = vld [vmem:[%s220 + $0x2c0] sm:$0xf]
        %v378 = vld [vmem:[%s220 + $0x2c4] sm:$0xff]
        %v379 = vld [vmem:[%s220 + $0x2cc] sm:$0xf]
        %v380 = vld [vmem:[%s220 + $0x2d0] sm:$0xff]
        %v381 = vld [vmem:[%s220 + $0x2d8] sm:$0xf]
        %v382 = vld [vmem:[%s220 + $0x2dc] sm:$0xff]
        %v383 = vld [vmem:[%s220 + $0x2e4] sm:$0xf]
        %v384 = vld [vmem:[%s220 + $0x2e8] sm:$0xff]
        %v385 = vld [vmem:[%s220 + $0x2f0] sm:$0xf]
        %v386 = vld [vmem:[%s220 + $0x2f4] sm:$0xff]
        %v387 = vld [vmem:[%s220 + $0x2fc] sm:$0xf]
        %v388 = vld [vmem:[#allocation5] sm:$0xf]
        %v389 = vld [vmem:[#allocation5 + $0x4] sm:$0xf]
        %v390 = vld [vmem:[#allocation5 + $0x8] sm:$0xf]
        %v391 = vld [vmem:[#allocation5 + $0xc] sm:$0xf]
        %v392 = vld [vmem:[#allocation5 + $0x10] sm:$0xf]
        %v393 = vld [vmem:[#allocation5 + $0x14] sm:$0xf]
        %v394 = vld [vmem:[#allocation5 + $0x18] sm:$0xf]
        %v395 = vld [vmem:[#allocation5 + $0x1c] sm:$0xf]
        %v396 = vld [vmem:[#allocation5 + $0x20] sm:$0xf]
        %v397 = vld [vmem:[#allocation5 + $0x24] sm:$0xf]
        %v398 = vld [vmem:[#allocation5 + $0x28] sm:$0xf]
        %v399 = vld [vmem:[#allocation5 + $0x2c] sm:$0xf]
        %v400 = vld [vmem:[#allocation5 + $0x30] sm:$0xf]
        %v401 = vld [vmem:[#allocation5 + $0x34] sm:$0xf]
        %v402 = vld [vmem:[#allocation5 + $0x38] sm:$0xf]
        %v403 = vld [vmem:[#allocation5 + $0x3c] sm:$0xf]
        %v404 = vld [vmem:[#allocation5 + $0x40] sm:$0xf]
        %v405 = vld [vmem:[#allocation5 + $0x44] sm:$0xf]
        %v406 = vld [vmem:[#allocation5 + $0x48] sm:$0xf]
        %v407 = vld [vmem:[#allocation5 + $0x4c] sm:$0xf]
        %v408 = vld [vmem:[#allocation5 + $0x50] sm:$0xf]
        %v409 = vld [vmem:[#allocation5 + $0x54] sm:$0xf]
        %v410 = vld [vmem:[#allocation5 + $0x58] sm:$0xf]
        %v411 = vld [vmem:[#allocation5 + $0x5c] sm:$0xf]
        %v412 = vld [vmem:[#allocation5 + $0x60] sm:$0xf]
        %v413 = vld [vmem:[#allocation5 + $0x64] sm:$0xf]
        %v414 = vld [vmem:[#allocation5 + $0x68] sm:$0xf]
        %v415 = vld [vmem:[#allocation5 + $0x6c] sm:$0xf]
        %v416 = vld [vmem:[#allocation5 + $0x70] sm:$0xf]
        %v417 = vld [vmem:[#allocation5 + $0x74] sm:$0xf]
        %v418 = vld [vmem:[#allocation5 + $0x78] sm:$0xf]
        %v419 = vld [vmem:[#allocation5 + $0x7c] sm:$0xf]
        %v420 = vld [vmem:[#allocation5 + $0x80] sm:$0xf]
        %v421 = vld [vmem:[#allocation5 + $0x84] sm:$0xf]
        %v422 = vld [vmem:[#allocation5 + $0x88] sm:$0xf]
        %v423 = vld [vmem:[#allocation5 + $0x8c] sm:$0xf]
        %v424 = vld [vmem:[#allocation5 + $0x90] sm:$0xf]
        %v425 = vld [vmem:[#allocation5 + $0x94] sm:$0xf]
        %v426 = vld [vmem:[#allocation5 + $0x98] sm:$0xf]
        %v427 = vld [vmem:[#allocation5 + $0x9c] sm:$0xf]
        %v428 = vld [vmem:[#allocation5 + $0xa0] sm:$0xf]
        %v429 = vld [vmem:[#allocation5 + $0xa4] sm:$0xf]
        %v430 = vld [vmem:[#allocation5 + $0xa8] sm:$0xf]
        %v431 = vld [vmem:[#allocation5 + $0xac] sm:$0xf]
        %v432 = vld [vmem:[#allocation5 + $0xb0] sm:$0xf]
        %v433 = vld [vmem:[#allocation5 + $0xb4] sm:$0xf]
        %v434 = vld [vmem:[#allocation5 + $0xb8] sm:$0xf]
        %v563 = vunpack.c.l.b16 %v260
        %v564 = vunpack.c.h.b16 %v260
        %v565 = vunpack.c.l.b16 %v261
        %v566 = vunpack.c.l.b16 %v262
        %v567 = vunpack.c.h.b16 %v262
        %v568 = vunpack.c.l.b16 %v263
        %v569 = vunpack.c.l.b16 %v264
        %v570 = vunpack.c.h.b16 %v264
        %v571 = vunpack.c.l.b16 %v265
        %v572 = vunpack.c.l.b16 %v266
        %v573 = vunpack.c.h.b16 %v266
        %v574 = vunpack.c.l.b16 %v267
        %v575 = vunpack.c.l.b16 %v268
        %v576 = vunpack.c.h.b16 %v268
        %v577 = vunpack.c.l.b16 %v269
        %v578 = vunpack.c.l.b16 %v270
        %v579 = vunpack.c.h.b16 %v270
        %v580 = vunpack.c.l.b16 %v271
        %v581 = vunpack.c.l.b16 %v272
        %v582 = vunpack.c.h.b16 %v272
        %v583 = vunpack.c.l.b16 %v273
        %v584 = vunpack.c.l.b16 %v274
        %v585 = vunpack.c.h.b16 %v274
        %v586 = vunpack.c.l.b16 %v275
        %v587 = vunpack.c.l.b16 %v276
        %v588 = vunpack.c.h.b16 %v276
        %v589 = vunpack.c.l.b16 %v277
        %v590 = vunpack.c.l.b16 %v278
        %v591 = vunpack.c.h.b16 %v278
        %v592 = vunpack.c.l.b16 %v279
        %v593 = vunpack.c.l.b16 %v280
        %v594 = vunpack.c.h.b16 %v280
        %v595 = vunpack.c.l.b16 %v281
        %v596 = vunpack.c.l.b16 %v282
        %v597 = vunpack.c.h.b16 %v282
        %v598 = vunpack.c.l.b16 %v283
        %v599 = vunpack.c.l.b16 %v284
        %v600 = vunpack.c.h.b16 %v284
        %v601 = vunpack.c.l.b16 %v285
        %v602 = vunpack.c.l.b16 %v286
        %v603 = vunpack.c.h.b16 %v286
        %v604 = vunpack.c.l.b16 %v287
        %v605 = vunpack.c.l.b16 %v288
        %v606 = vunpack.c.h.b16 %v288
        %v607 = vunpack.c.l.b16 %v289
        %v608 = vunpack.c.l.b16 %v290
        %v609 = vunpack.c.h.b16 %v290
        %v610 = vunpack.c.l.b16 %v291
        %v611 = vunpack.c.l.b16 %v292
        %v612 = vunpack.c.h.b16 %v292
        %v613 = vunpack.c.l.b16 %v293
        %v614 = vunpack.c.l.b16 %v294
        %v615 = vunpack.c.h.b16 %v294
        %v616 = vunpack.c.l.b16 %v295
        %v617 = vunpack.c.l.b16 %v296
        %v618 = vunpack.c.h.b16 %v296
        %v619 = vunpack.c.l.b16 %v297
        %v620 = vunpack.c.l.b16 %v298
        %v621 = vunpack.c.h.b16 %v298
        %v622 = vunpack.c.l.b16 %v299
        %v623 = vunpack.c.l.b16 %v300
        %v624 = vunpack.c.h.b16 %v300
        %v625 = vunpack.c.l.b16 %v301
        %v626 = vunpack.c.l.b16 %v302
        %v627 = vunpack.c.h.b16 %v302
        %v628 = vunpack.c.l.b16 %v303
        %v629 = vunpack.c.l.b16 %v304
        %v630 = vunpack.c.h.b16 %v304
        %v631 = vunpack.c.l.b16 %v305
        %v632 = vunpack.c.l.b16 %v306
        %v633 = vunpack.c.h.b16 %v306
        %v634 = vunpack.c.l.b16 %v307
        %v635 = vunpack.c.l.b16 %v308
        %v636 = vunpack.c.h.b16 %v308
        %v637 = vunpack.c.l.b16 %v309
        %v638 = vunpack.c.l.b16 %v310
        %v639 = vunpack.c.h.b16 %v310
        %v640 = vunpack.c.l.b16 %v311
        %v641 = vunpack.c.l.b16 %v312
        %v642 = vunpack.c.h.b16 %v312
        %v643 = vunpack.c.l.b16 %v313
        %v644 = vunpack.c.l.b16 %v314
        %v645 = vunpack.c.h.b16 %v314
        %v646 = vunpack.c.l.b16 %v315
        %v647 = vunpack.c.l.b16 %v316
        %v648 = vunpack.c.h.b16 %v316
        %v649 = vunpack.c.l.b16 %v317
        %v650 = vunpack.c.l.b16 %v318
        %v651 = vunpack.c.h.b16 %v318
        %v652 = vunpack.c.l.b16 %v319
        %v653 = vunpack.c.l.b16 %v320
        %v654 = vunpack.c.h.b16 %v320
        %v655 = vunpack.c.l.b16 %v321
        %v656 = vunpack.c.l.b16 %v322
        %v657 = vunpack.c.h.b16 %v322
        %v658 = vunpack.c.l.b16 %v323
        %v659 = vunpack.c.l.b16 %v324
        %v660 = vunpack.c.h.b16 %v324
        %v661 = vunpack.c.l.b16 %v325
        %v662 = vunpack.c.l.b16 %v326
        %v663 = vunpack.c.h.b16 %v326
        %v664 = vunpack.c.l.b16 %v327
        %v665 = vunpack.c.l.b16 %v328
        %v666 = vunpack.c.h.b16 %v328
        %v667 = vunpack.c.l.b16 %v329
        %v668 = vunpack.c.l.b16 %v330
        %v669 = vunpack.c.h.b16 %v330
        %v670 = vunpack.c.l.b16 %v331
        %v671 = vunpack.c.l.b16 %v332
        %v672 = vunpack.c.h.b16 %v332
        %v673 = vunpack.c.l.b16 %v333
        %v674 = vunpack.c.l.b16 %v334
        %v675 = vunpack.c.h.b16 %v334
        %v676 = vunpack.c.l.b16 %v335
        %v677 = vunpack.c.l.b16 %v336
        %v678 = vunpack.c.h.b16 %v336
        %v679 = vunpack.c.l.b16 %v337
        %v680 = vunpack.c.l.b16 %v338
        %v681 = vunpack.c.h.b16 %v338
        %v682 = vunpack.c.l.b16 %v339
        %v683 = vunpack.c.l.b16 %v340
        %v684 = vunpack.c.h.b16 %v340
        %v685 = vunpack.c.l.b16 %v341
        %v686 = vunpack.c.l.b16 %v342
        %v687 = vunpack.c.h.b16 %v342
        %v688 = vunpack.c.l.b16 %v343
        %v689 = vunpack.c.l.b16 %v344
        %v690 = vunpack.c.h.b16 %v344
        %v691 = vunpack.c.l.b16 %v345
        %v692 = vunpack.c.l.b16 %v346
        %v693 = vunpack.c.h.b16 %v346
        %v694 = vunpack.c.l.b16 %v347
        %v695 = vunpack.c.l.b16 %v348
        %v696 = vunpack.c.h.b16 %v348
        %v697 = vunpack.c.l.b16 %v349
        %v698 = vunpack.c.l.b16 %v350
        %v699 = vunpack.c.h.b16 %v350
        %v700 = vunpack.c.l.b16 %v351
        %v701 = vunpack.c.l.b16 %v352
        %v702 = vunpack.c.h.b16 %v352
        %v703 = vunpack.c.l.b16 %v353
        %v704 = vunpack.c.l.b16 %v354
        %v705 = vunpack.c.h.b16 %v354
        %v706 = vunpack.c.l.b16 %v355
        %v707 = vunpack.c.l.b16 %v356
        %v708 = vunpack.c.h.b16 %v356
        %v709 = vunpack.c.l.b16 %v357
        %v710 = vunpack.c.l.b16 %v358
        %v711 = vunpack.c.h.b16 %v358
        %v712 = vunpack.c.l.b16 %v359
        %v713 = vunpack.c.l.b16 %v360
        %v714 = vunpack.c.h.b16 %v360
        %v715 = vunpack.c.l.b16 %v361
        %v716 = vunpack.c.l.b16 %v362
        %v717 = vunpack.c.h.b16 %v362
        %v718 = vunpack.c.l.b16 %v363
        %v719 = vunpack.c.l.b16 %v364
        %v720 = vunpack.c.h.b16 %v364
        %v721 = vunpack.c.l.b16 %v365
        %v722 = vunpack.c.l.b16 %v366
        %v723 = vunpack.c.h.b16 %v366
        %v724 = vunpack.c.l.b16 %v367
        %v725 = vunpack.c.l.b16 %v368
        %v726 = vunpack.c.h.b16 %v368
        %v727 = vunpack.c.l.b16 %v369
        %v728 = vunpack.c.l.b16 %v370
        %v729 = vunpack.c.h.b16 %v370
        %v730 = vunpack.c.l.b16 %v371
        %v731 = vunpack.c.l.b16 %v372
        %v732 = vunpack.c.h.b16 %v372
        %v733 = vunpack.c.l.b16 %v373
        %v734 = vunpack.c.l.b16 %v374
        %v735 = vunpack.c.h.b16 %v374
        %v736 = vunpack.c.l.b16 %v375
        %v737 = vunpack.c.l.b16 %v376
        %v738 = vunpack.c.h.b16 %v376
        %v739 = vunpack.c.l.b16 %v377
        %v740 = vunpack.c.l.b16 %v378
        %v741 = vunpack.c.h.b16 %v378
        %v742 = vunpack.c.l.b16 %v379
        %v743 = vunpack.c.l.b16 %v380
        %v744 = vunpack.c.h.b16 %v380
        %v745 = vunpack.c.l.b16 %v381
        %v746 = vunpack.c.l.b16 %v382
        %v747 = vunpack.c.h.b16 %v382
        %v748 = vunpack.c.l.b16 %v383
        %v749 = vunpack.c.l.b16 %v384
        %v750 = vunpack.c.h.b16 %v384
        %v751 = vunpack.c.l.b16 %v385
        %v752 = vunpack.c.l.b16 %v386
        %v753 = vunpack.c.h.b16 %v386
        %v754 = vunpack.c.l.b16 %v387
        %v755 = vpack.c.b16 %v566, %v563
        %v756 = vpack.c.b16 %v567, %v564
        %v757 = vpack.c.b16 %v568, %v565
        %v758 = vpack.c.b16 %v572, %v569
        %v759 = vpack.c.b16 %v573, %v570
        %v760 = vpack.c.b16 %v574, %v571
        %v761 = vpack.c.b16 %v578, %v575
        %v762 = vpack.c.b16 %v579, %v576
        %v763 = vpack.c.b16 %v580, %v577
        %v764 = vpack.c.b16 %v584, %v581
        %v765 = vpack.c.b16 %v585, %v582
        %v766 = vpack.c.b16 %v586, %v583
        %v767 = vpack.c.b16 %v590, %v587
        %v768 = vpack.c.b16 %v591, %v588
        %v769 = vpack.c.b16 %v592, %v589
        %v770 = vpack.c.b16 %v596, %v593
        %v771 = vpack.c.b16 %v597, %v594
        %v772 = vpack.c.b16 %v598, %v595
        %v773 = vpack.c.b16 %v602, %v599
        %v774 = vpack.c.b16 %v603, %v600
        %v775 = vpack.c.b16 %v604, %v601
        %v776 = vpack.c.b16 %v608, %v605
        %v777 = vpack.c.b16 %v609, %v606
        %v778 = vpack.c.b16 %v610, %v607
        %v779 = vpack.c.b16 %v614, %v611
        %v780 = vpack.c.b16 %v615, %v612
        %v781 = vpack.c.b16 %v616, %v613
        %v782 = vpack.c.b16 %v620, %v617
        %v783 = vpack.c.b16 %v621, %v618
        %v784 = vpack.c.b16 %v622, %v619
        %v785 = vpack.c.b16 %v626, %v623
        %v786 = vpack.c.b16 %v627, %v624
        %v787 = vpack.c.b16 %v628, %v625
        %v788 = vpack.c.b16 %v632, %v629
        %v789 = vpack.c.b16 %v633, %v630
        %v790 = vpack.c.b16 %v634, %v631
        %v791 = vpack.c.b16 %v638, %v635
        %v792 = vpack.c.b16 %v639, %v636
        %v793 = vpack.c.b16 %v640, %v637
        %v794 = vpack.c.b16 %v644, %v641
        %v795 = vpack.c.b16 %v645, %v642
        %v796 = vpack.c.b16 %v646, %v643
        %v797 = vpack.c.b16 %v650, %v647
        %v798 = vpack.c.b16 %v651, %v648
        %v799 = vpack.c.b16 %v652, %v649
        %v800 = vpack.c.b16 %v656, %v653
        %v801 = vpack.c.b16 %v657, %v654
        %v802 = vpack.c.b16 %v658, %v655
        %v803 = vpack.c.b16 %v662, %v659
        %v804 = vpack.c.b16 %v663, %v660
        %v805 = vpack.c.b16 %v664, %v661
        %v806 = vpack.c.b16 %v668, %v665
        %v807 = vpack.c.b16 %v669, %v666
        %v808 = vpack.c.b16 %v670, %v667
        %v809 = vpack.c.b16 %v674, %v671
        %v810 = vpack.c.b16 %v675, %v672
        %v811 = vpack.c.b16 %v676, %v673
        %v812 = vpack.c.b16 %v680, %v677
        %v813 = vpack.c.b16 %v681, %v678
        %v814 = vpack.c.b16 %v682, %v679
        %v815 = vpack.c.b16 %v686, %v683
        %v816 = vpack.c.b16 %v687, %v684
        %v817 = vpack.c.b16 %v688, %v685
        %v818 = vpack.c.b16 %v692, %v689
        %v819 = vpack.c.b16 %v693, %v690
        %v820 = vpack.c.b16 %v694, %v691
        %v821 = vpack.c.b16 %v698, %v695
        %v822 = vpack.c.b16 %v699, %v696
        %v823 = vpack.c.b16 %v700, %v697
        %v824 = vpack.c.b16 %v704, %v701
        %v825 = vpack.c.b16 %v705, %v702
        %v826 = vpack.c.b16 %v706, %v703
        %v827 = vpack.c.b16 %v710, %v707
        %v828 = vpack.c.b16 %v711, %v708
        %v829 = vpack.c.b16 %v712, %v709
        %v830 = vpack.c.b16 %v716, %v713
        %v831 = vpack.c.b16 %v717, %v714
        %v832 = vpack.c.b16 %v718, %v715
        %v833 = vpack.c.b16 %v722, %v719
        %v834 = vpack.c.b16 %v723, %v720
        %v835 = vpack.c.b16 %v724, %v721
        %v836 = vpack.c.b16 %v728, %v725
        %v837 = vpack.c.b16 %v729, %v726
        %v838 = vpack.c.b16 %v730, %v727
        %v839 = vpack.c.b16 %v734, %v731
        %v840 = vpack.c.b16 %v735, %v732
        %v841 = vpack.c.b16 %v736, %v733
        %v842 = vpack.c.b16 %v740, %v737
        %v843 = vpack.c.b16 %v741, %v738
        %v844 = vpack.c.b16 %v742, %v739
        %v845 = vpack.c.b16 %v746, %v743
        %v846 = vpack.c.b16 %v747, %v744
        %v847 = vpack.c.b16 %v748, %v745
        %v848 = vpack.c.b16 %v752, %v749
        %v849 = vpack.c.b16 %v753, %v750
        %v850 = vpack.c.b16 %v754, %v751
        %v962 = vunpack.c.l.b16 %v388
        %v963 = vunpack.c.l.b16 %v389
        %v964 = vunpack.c.l.b16 %v390
        %v965 = vunpack.c.l.b16 %v391
        %v966 = vunpack.c.l.b16 %v392
        %v967 = vunpack.c.l.b16 %v393
        %v968 = vunpack.c.l.b16 %v394
        %v969 = vunpack.c.l.b16 %v395
        %v970 = vunpack.c.l.b16 %v396
        %v971 = vunpack.c.l.b16 %v397
        %v972 = vunpack.c.l.b16 %v398
        %v973 = vunpack.c.l.b16 %v399
        %v974 = vunpack.c.l.b16 %v400
        %v975 = vunpack.c.l.b16 %v401
        %v976 = vunpack.c.l.b16 %v402
        %v977 = vunpack.c.l.b16 %v403
        %v978 = vunpack.c.l.b16 %v404
        %v979 = vunpack.c.l.b16 %v405
        %v980 = vunpack.c.l.b16 %v406
        %v981 = vunpack.c.l.b16 %v407
        %v982 = vunpack.c.l.b16 %v408
        %v983 = vunpack.c.l.b16 %v409
        %v984 = vunpack.c.l.b16 %v410
        %v985 = vunpack.c.l.b16 %v411
        %v986 = vunpack.c.l.b16 %v412
        %v987 = vunpack.c.l.b16 %v413
        %v988 = vunpack.c.l.b16 %v414
        %v989 = vunpack.c.l.b16 %v415
        %v990 = vunpack.c.l.b16 %v416
        %v991 = vunpack.c.l.b16 %v417
        %v992 = vunpack.c.l.b16 %v418
        %v993 = vunpack.c.l.b16 %v419
        %v994 = vunpack.c.l.b16 %v420
        %v995 = vunpack.c.l.b16 %v421
        %v996 = vunpack.c.l.b16 %v422
        %v997 = vunpack.c.l.b16 %v423
        %v998 = vunpack.c.l.b16 %v424
        %v999 = vunpack.c.l.b16 %v425
        %v1000 = vunpack.c.l.b16 %v426
        %v1001 = vunpack.c.l.b16 %v427
        %v1002 = vunpack.c.l.b16 %v428
        %v1003 = vunpack.c.l.b16 %v429
        %v1004 = vunpack.c.l.b16 %v430
        %v1005 = vunpack.c.l.b16 %v431
        %v1006 = vunpack.c.l.b16 %v432
        %v1007 = vunpack.c.l.b16 %v433
        %v1008 = vunpack.c.l.b16 %v434
        %v1009 = vpack.c.b16 %v963, %v962
        %v1010 = vpack.c.b16 %v965, %v964
        %v1011 = vpack.c.b16 %v967, %v966
        %v1012 = vpack.c.b16 %v969, %v968
        %v1013 = vpack.c.b16 %v971, %v970
        %v1014 = vpack.c.b16 %v973, %v972
        %v1015 = vpack.c.b16 %v975, %v974
        %v1016 = vpack.c.b16 %v977, %v976
        %v1017 = vpack.c.b16 %v979, %v978
        %v1018 = vpack.c.b16 %v981, %v980
        %v1019 = vpack.c.b16 %v983, %v982
        %v1020 = vpack.c.b16 %v985, %v984
        %v1021 = vpack.c.b16 %v987, %v986
        %v1022 = vpack.c.b16 %v989, %v988
        %v1023 = vpack.c.b16 %v991, %v990
        %v1024 = vpack.c.b16 %v993, %v992
        %v1025 = vpack.c.b16 %v995, %v994
        %v1026 = vpack.c.b16 %v997, %v996
        %v1027 = vpack.c.b16 %v999, %v998
        %v1028 = vpack.c.b16 %v1001, %v1000
        %v1029 = vpack.c.b16 %v1003, %v1002
        %v1030 = vpack.c.b16 %v1005, %v1004
        %v1031 = vpack.c.b16 %v1007, %v1006
        %v1032 = vpack.c.b16 %v1008, %v1008
        %vm1056 = vcmask 973824
        %v1058 = vsel %vm1056, %v757, 0
        %v1061 = vsel %vm1056, %v760, 0
        %v1064 = vsel %vm1056, %v763, 0
        %v1067 = vsel %vm1056, %v766, 0
        %v1070 = vsel %vm1056, %v769, 0
        %v1073 = vsel %vm1056, %v772, 0
        %v1076 = vsel %vm1056, %v775, 0
        %v1079 = vsel %vm1056, %v778, 0
        %v1082 = vsel %vm1056, %v781, 0
        %v1085 = vsel %vm1056, %v784, 0
        %v1088 = vsel %vm1056, %v787, 0
        %v1091 = vsel %vm1056, %v790, 0
        %v1094 = vsel %vm1056, %v793, 0
        %v1097 = vsel %vm1056, %v796, 0
        %v1100 = vsel %vm1056, %v799, 0
        %v1103 = vsel %vm1056, %v802, 0
        %v1106 = vsel %vm1056, %v805, 0
        %v1109 = vsel %vm1056, %v808, 0
        %v1112 = vsel %vm1056, %v811, 0
        %v1115 = vsel %vm1056, %v814, 0
        %v1118 = vsel %vm1056, %v817, 0
        %v1121 = vsel %vm1056, %v820, 0
        %v1124 = vsel %vm1056, %v823, 0
        %v1127 = vsel %vm1056, %v826, 0
        %v1130 = vsel %vm1056, %v829, 0
        %v1133 = vsel %vm1056, %v832, 0
        %v1136 = vsel %vm1056, %v835, 0
        %v1139 = vsel %vm1056, %v838, 0
        %v1142 = vsel %vm1056, %v841, 0
        %v1145 = vsel %vm1056, %v844, 0
        %v1148 = vsel %vm1056, %v847, 0
        %v1151 = vsel %vm1056, %v850, 0
        %vm1153 = vcmask 1042432
        %vm1154 = vcmask 1043456
        %v1155 = vsel %vm1153, 4294967295, 65535
        %v1156 = vsel %vm1154, %v1155, 0
        %v1158 = vand.u32 %v1032, %v1156
        %1160 = vmatprep.subr.bf16.mxu0 0
        %1161 = vmatpush1.bf16.msra.mxu0 %v1009
        %1162 = vmatprep.subr.bf16.mxu0 0
        %1163 = vmatpush1.bf16.msra.mxu0 %v1010
        %1164 = vmatprep.subr.bf16.mxu0 0
        %1165 = vmatpush1.bf16.msra.mxu0 %v1011
        %1166 = vmatprep.subr.bf16.mxu0 0
        %1167 = vmatpush1.bf16.msra.mxu0 %v1012
        %1168 = vmatprep.subr.bf16.mxu0 0
        %1169 = vmatpush1.bf16.msra.mxu0 %v1013
        %1170 = vmatprep.subr.bf16.mxu0 0
        %1171 = vmatpush1.bf16.msra.mxu0 %v1014
        %1172 = vmatprep.subr.bf16.mxu0 0
        %1173 = vmatpush1.bf16.msra.mxu0 %v1015
        %1174 = vmatprep.subr.bf16.mxu0 0
        %1175 = vmatpush1.bf16.msra.mxu0 %v1016
        %1176 = vmatprep.subr.bf16.mxu0 0
        %1177 = vmatpush1.bf16.msra.mxu0 %v1017
        %1178 = vmatprep.subr.bf16.mxu0 0
        %1179 = vmatpush1.bf16.msra.mxu0 %v1018
        %1180 = vmatprep.subr.bf16.mxu0 0
        %1181 = vmatpush1.bf16.msra.mxu0 %v1019
        %1182 = vmatprep.subr.bf16.mxu0 0
        %1183 = vmatpush1.bf16.msra.mxu0 %v1020
        %1184 = vmatprep.subr.bf16.mxu0 0
        %1185 = vmatpush1.bf16.msra.mxu0 %v1021
        %1186 = vmatprep.subr.bf16.mxu0 0
        %1187 = vmatpush1.bf16.msra.mxu0 %v1022
        %1188 = vmatprep.subr.bf16.mxu0 0
        %1189 = vmatpush1.bf16.msra.mxu0 %v1023
        %1190 = vmatprep.subr.bf16.mxu0 0
        %1191 = vmatpush1.bf16.msra.mxu0 %v1024
        %1192 = vmatprep.mubr.bf16.mxu0 %v756
        %1193 = vmatmul.mubr.bf16.gmra.mrb[0].mxu0 %v755
        %v1194 = vpop.f32.mrb[0].mxu0
        %v1195 = vadd.f32 0.0, %v1194
        %v1196 = vpop.f32.mrb[0].mxu0
        %v1197 = vpop.f32.mrb[0].mxu0
        %v1198 = vadd.f32 0.0, %v1197
        %v1199 = vpop.f32.mrb[0].mxu0
        %1200 = vmatprep.mubr.bf16.mxu0 %v759
        %1201 = vmatmul.mubr.bf16.gmra.mrb[0].mxu0 %v758
        %v1202 = vpop.f32.mrb[0].mxu0
        %v1203 = vadd.f32 0.0, %v1202
        %v1204 = vpop.f32.mrb[0].mxu0
        %v1205 = vpop.f32.mrb[0].mxu0
        %v1206 = vadd.f32 0.0, %v1205
        %v1207 = vpop.f32.mrb[0].mxu0
        %1208 = vmatprep.mubr.bf16.mxu0 %v762
        %1209 = vmatmul.mubr.bf16.gmra.mrb[0].mxu0 %v761
        %v1210 = vpop.f32.mrb[0].mxu0
        %v1211 = vadd.f32 0.0, %v1210
        %v1212 = vpop.f32.mrb[0].mxu0
        %v1213 = vpop.f32.mrb[0].mxu0
        %v1214 = vadd.f32 0.0, %v1213
        %v1215 = vpop.f32.mrb[0].mxu0
        %1216 = vmatprep.mubr.bf16.mxu0 %v765
        %1217 = vmatmul.mubr.bf16.gmra.mrb[0].mxu0 %v764
        %v1218 = vpop.f32.mrb[0].mxu0
        %v1219 = vadd.f32 0.0, %v1218
        %v1220 = vpop.f32.mrb[0].mxu0
        %v1221 = vpop.f32.mrb[0].mxu0
        %v1222 = vadd.f32 0.0, %v1221
        %v1223 = vpop.f32.mrb[0].mxu0
        %1224 = vmatprep.mubr.bf16.mxu0 %v768
        %1225 = vmatmul.mubr.bf16.gmra.mrb[0].mxu0 %v767
        %v1226 = vpop.f32.mrb[0].mxu0
        %v1227 = vadd.f32 0.0, %v1226
        %v1228 = vpop.f32.mrb[0].mxu0
        %v1229 = vpop.f32.mrb[0].mxu0
        %v1230 = vadd.f32 0.0, %v1229
        %v1231 = vpop.f32.mrb[0].mxu0
        %1232 = vmatprep.mubr.bf16.mxu0 %v771
        %1233 = vmatmul.mubr.bf16.gmra.mrb[0].mxu0 %v770
        %v1234 = vpop.f32.mrb[0].mxu0
        %v1235 = vadd.f32 0.0, %v1234
        %v1236 = vpop.f32.mrb[0].mxu0
        %v1237 = vpop.f32.mrb[0].mxu0
        %v1238 = vadd.f32 0.0, %v1237
        %v1239 = vpop.f32.mrb[0].mxu0
        %1240 = vmatprep.mubr.bf16.mxu0 %v774
        %1241 = vmatmul.mubr.bf16.gmra.mrb[0].mxu0 %v773
        %v1242 = vpop.f32.mrb[0].mxu0
        %v1243 = vadd.f32 0.0, %v1242
        %v1244 = vpop.f32.mrb[0].mxu0
        %v1245 = vpop.f32.mrb[0].mxu0
        %v1246 = vadd.f32 0.0, %v1245
        %v1247 = vpop.f32.mrb[0].mxu0
        %1248 = vmatprep.mubr.bf16.mxu0 %v777
        %1249 = vmatmul.mubr.bf16.gmra.mrb[0].mxu0 %v776
        %v1250 = vpop.f32.mrb[0].mxu0
        %v1251 = vadd.f32 0.0, %v1250
        %v1252 = vpop.f32.mrb[0].mxu0
        %v1253 = vpop.f32.mrb[0].mxu0
        %v1254 = vadd.f32 0.0, %v1253
        %v1255 = vpop.f32.mrb[0].mxu0
        %1256 = vmatprep.mubr.bf16.mxu0 %v780
        %1257 = vmatmul.mubr.bf16.gmra.mrb[0].mxu0 %v779
        %v1258 = vpop.f32.mrb[0].mxu0
        %v1259 = vadd.f32 0.0, %v1258
        %v1260 = vpop.f32.mrb[0].mxu0
        %v1261 = vpop.f32.mrb[0].mxu0
        %v1262 = vadd.f32 0.0, %v1261
        %v1263 = vpop.f32.mrb[0].mxu0
        %1264 = vmatprep.mubr.bf16.mxu0 %v783
        %1265 = vmatmul.mubr.bf16.gmra.mrb[0].mxu0 %v782
        %v1266 = vpop.f32.mrb[0].mxu0
        %v1267 = vadd.f32 0.0, %v1266
        %v1268 = vpop.f32.mrb[0].mxu0
        %v1269 = vpop.f32.mrb[0].mxu0
        %v1270 = vadd.f32 0.0, %v1269
        %v1271 = vpop.f32.mrb[0].mxu0
        %1272 = vmatprep.mubr.bf16.mxu0 %v786
        %1273 = vmatmul.mubr.bf16.gmra.mrb[0].mxu0 %v785
        %v1274 = vpop.f32.mrb[0].mxu0
        %v1275 = vadd.f32 0.0, %v1274
        %v1276 = vpop.f32.mrb[0].mxu0
        %v1277 = vpop.f32.mrb[0].mxu0
        %v1278 = vadd.f32 0.0, %v1277
        %v1279 = vpop.f32.mrb[0].mxu0
        %1280 = vmatprep.mubr.bf16.mxu0 %v789
        %1281 = vmatmul.mubr.bf16.gmra.mrb[0].mxu0 %v788
        %v1282 = vpop.f32.mrb[0].mxu0
        %v1283 = vadd.f32 0.0, %v1282
        %v1284 = vpop.f32.mrb[0].mxu0
        %v1285 = vpop.f32.mrb[0].mxu0
        %v1286 = vadd.f32 0.0, %v1285
        %v1287 = vpop.f32.mrb[0].mxu0
        %1288 = vmatprep.mubr.bf16.mxu0 %v792
        %1289 = vmatmul.mubr.bf16.gmra.mrb[0].mxu0 %v791
        %v1290 = vpop.f32.mrb[0].mxu0
        %v1291 = vadd.f32 0.0, %v1290
        %v1292 = vpop.f32.mrb[0].mxu0
        %v1293 = vpop.f32.mrb[0].mxu0
        %v1294 = vadd.f32 0.0, %v1293
        %v1295 = vpop.f32.mrb[0].mxu0
        %1296 = vmatprep.mubr.bf16.mxu0 %v795
        %1297 = vmatmul.mubr.bf16.gmra.mrb[0].mxu0 %v794
        %v1298 = vpop.f32.mrb[0].mxu0
        %v1299 = vadd.f32 0.0, %v1298
        %v1300 = vpop.f32.mrb[0].mxu0
        %v1301 = vpop.f32.mrb[0].mxu0
        %v1302 = vadd.f32 0.0, %v1301
        %v1303 = vpop.f32.mrb[0].mxu0
        %1304 = vmatprep.mubr.bf16.mxu0 %v798
        %1305 = vmatmul.mubr.bf16.gmra.mrb[0].mxu0 %v797
        %v1306 = vpop.f32.mrb[0].mxu0
        %v1307 = vadd.f32 0.0, %v1306
        %v1308 = vpop.f32.mrb[0].mxu0
        %v1309 = vpop.f32.mrb[0].mxu0
        %v1310 = vadd.f32 0.0, %v1309
        %v1311 = vpop.f32.mrb[0].mxu0
        %1312 = vmatprep.mubr.bf16.mxu0 %v801
        %1313 = vmatmul.mubr.bf16.gmra.mrb[0].mxu0 %v800
        %v1314 = vpop.f32.mrb[0].mxu0
        %v1315 = vadd.f32 0.0, %v1314
        %v1316 = vpop.f32.mrb[0].mxu0
        %v1317 = vpop.f32.mrb[0].mxu0
        %v1318 = vadd.f32 0.0, %v1317
        %v1319 = vpop.f32.mrb[0].mxu0
        %1320 = vmatprep.mubr.bf16.mxu0 %v804
        %1321 = vmatmul.mubr.bf16.gmra.mrb[0].mxu0 %v803
        %v1322 = vpop.f32.mrb[0].mxu0
        %v1323 = vadd.f32 0.0, %v1322
        %v1324 = vpop.f32.mrb[0].mxu0
        %v1325 = vpop.f32.mrb[0].mxu0
        %v1326 = vadd.f32 0.0, %v1325
        %v1327 = vpop.f32.mrb[0].mxu0
        %1328 = vmatprep.mubr.bf16.mxu0 %v807
        %1329 = vmatmul.mubr.bf16.gmra.mrb[0].mxu0 %v806
        %v1330 = vpop.f32.mrb[0].mxu0
        %v1331 = vadd.f32 0.0, %v1330
        %v1332 = vpop.f32.mrb[0].mxu0
        %v1333 = vpop.f32.mrb[0].mxu0
        %v1334 = vadd.f32 0.0, %v1333
        %v1335 = vpop.f32.mrb[0].mxu0
        %1336 = vmatprep.mubr.bf16.mxu0 %v810
        %1337 = vmatmul.mubr.bf16.gmra.mrb[0].mxu0 %v809
        %v1338 = vpop.f32.mrb[0].mxu0
        %v1339 = vadd.f32 0.0, %v1338
        %v1340 = vpop.f32.mrb[0].mxu0
        %v1341 = vpop.f32.mrb[0].mxu0
        %v1342 = vadd.f32 0.0, %v1341
        %v1343 = vpop.f32.mrb[0].mxu0
        %1344 = vmatprep.mubr.bf16.mxu0 %v813
        %1345 = vmatmul.mubr.bf16.gmra.mrb[0].mxu0 %v812
        %v1346 = vpop.f32.mrb[0].mxu0
        %v1347 = vadd.f32 0.0, %v1346
        %v1348 = vpop.f32.mrb[0].mxu0
        %v1349 = vpop.f32.mrb[0].mxu0
        %v1350 = vadd.f32 0.0, %v1349
        %v1351 = vpop.f32.mrb[0].mxu0
        %1352 = vmatprep.mubr.bf16.mxu0 %v816
        %1353 = vmatmul.mubr.bf16.gmra.mrb[0].mxu0 %v815
        %v1354 = vpop.f32.mrb[0].mxu0
        %v1355 = vadd.f32 0.0, %v1354
        %v1356 = vpop.f32.mrb[0].mxu0
        %v1357 = vpop.f32.mrb[0].mxu0
        %v1358 = vadd.f32 0.0, %v1357
        %v1359 = vpop.f32.mrb[0].mxu0
        %1360 = vmatprep.mubr.bf16.mxu0 %v819
        %1361 = vmatmul.mubr.bf16.gmra.mrb[0].mxu0 %v818
        %v1362 = vpop.f32.mrb[0].mxu0
        %v1363 = vadd.f32 0.0, %v1362
        %v1364 = vpop.f32.mrb[0].mxu0
        %v1365 = vpop.f32.mrb[0].mxu0
        %v1366 = vadd.f32 0.0, %v1365
        %v1367 = vpop.f32.mrb[0].mxu0
        %1368 = vmatprep.mubr.bf16.mxu0 %v822
        %1369 = vmatmul.mubr.bf16.gmra.mrb[0].mxu0 %v821
        %v1370 = vpop.f32.mrb[0].mxu0
        %v1371 = vadd.f32 0.0, %v1370
        %v1372 = vpop.f32.mrb[0].mxu0
        %v1373 = vpop.f32.mrb[0].mxu0
        %v1374 = vadd.f32 0.0, %v1373
        %v1375 = vpop.f32.mrb[0].mxu0
        %1376 = vmatprep.mubr.bf16.mxu0 %v825
        %1377 = vmatmul.mubr.bf16.gmra.mrb[0].mxu0 %v824
        %v1378 = vpop.f32.mrb[0].mxu0
        %v1379 = vadd.f32 0.0, %v1378
        %v1380 = vpop.f32.mrb[0].mxu0
        %v1381 = vpop.f32.mrb[0].mxu0
        %v1382 = vadd.f32 0.0, %v1381
        %v1383 = vpop.f32.mrb[0].mxu0
        %1384 = vmatprep.mubr.bf16.mxu0 %v828
        %1385 = vmatmul.mubr.bf16.gmra.mrb[0].mxu0 %v827
        %v1386 = vpop.f32.mrb[0].mxu0
        %v1387 = vadd.f32 0.0, %v1386
        %v1388 = vpop.f32.mrb[0].mxu0
        %v1389 = vpop.f32.mrb[0].mxu0
        %v1390 = vadd.f32 0.0, %v1389
        %v1391 = vpop.f32.mrb[0].mxu0
        %1392 = vmatprep.mubr.bf16.mxu0 %v831
        %1393 = vmatmul.mubr.bf16.gmra.mrb[0].mxu0 %v830
        %v1394 = vpop.f32.mrb[0].mxu0
        %v1395 = vadd.f32 0.0, %v1394
        %v1396 = vpop.f32.mrb[0].mxu0
        %v1397 = vpop.f32.mrb[0].mxu0
        %v1398 = vadd.f32 0.0, %v1397
        %v1399 = vpop.f32.mrb[0].mxu0
        %1400 = vmatprep.mubr.bf16.mxu0 %v834
        %1401 = vmatmul.mubr.bf16.gmra.mrb[0].mxu0 %v833
        %v1402 = vpop.f32.mrb[0].mxu0
        %v1403 = vadd.f32 0.0, %v1402
        %v1404 = vpop.f32.mrb[0].mxu0
        %v1405 = vpop.f32.mrb[0].mxu0
        %v1406 = vadd.f32 0.0, %v1405
        %v1407 = vpop.f32.mrb[0].mxu0
        %1408 = vmatprep.mubr.bf16.mxu0 %v837
        %1409 = vmatmul.mubr.bf16.gmra.mrb[0].mxu0 %v836
        %v1410 = vpop.f32.mrb[0].mxu0
        %v1411 = vadd.f32 0.0, %v1410
        %v1412 = vpop.f32.mrb[0].mxu0
        %v1413 = vpop.f32.mrb[0].mxu0
        %v1414 = vadd.f32 0.0, %v1413
        %v1415 = vpop.f32.mrb[0].mxu0
        %1416 = vmatprep.mubr.bf16.mxu0 %v840
        %1417 = vmatmul.mubr.bf16.gmra.mrb[0].mxu0 %v839
        %v1418 = vpop.f32.mrb[0].mxu0
        %v1419 = vadd.f32 0.0, %v1418
        %v1420 = vpop.f32.mrb[0].mxu0
        %v1421 = vpop.f32.mrb[0].mxu0
        %v1422 = vadd.f32 0.0, %v1421
        %v1423 = vpop.f32.mrb[0].mxu0
        %1424 = vmatprep.mubr.bf16.mxu0 %v843
        %1425 = vmatmul.mubr.bf16.gmra.mrb[0].mxu0 %v842
        %v1426 = vpop.f32.mrb[0].mxu0
        %v1427 = vadd.f32 0.0, %v1426
        %v1428 = vpop.f32.mrb[0].mxu0
        %v1429 = vpop.f32.mrb[0].mxu0
        %v1430 = vadd.f32 0.0, %v1429
        %v1431 = vpop.f32.mrb[0].mxu0
        %1432 = vmatprep.mubr.bf16.mxu0 %v846
        %1433 = vmatmul.mubr.bf16.gmra.mrb[0].mxu0 %v845
        %v1434 = vpop.f32.mrb[0].mxu0
        %v1435 = vadd.f32 0.0, %v1434
        %v1436 = vpop.f32.mrb[0].mxu0
        %v1437 = vpop.f32.mrb[0].mxu0
        %v1438 = vadd.f32 0.0, %v1437
        %v1439 = vpop.f32.mrb[0].mxu0
        %1440 = vmatprep.mubr.bf16.mxu0 %v849
        %1441 = vmatmul.mubr.bf16.gmra.mrb[0].mxu0 %v848
        %v1442 = vpop.f32.mrb[0].mxu0
        %v1443 = vadd.f32 0.0, %v1442
        %v1444 = vpop.f32.mrb[0].mxu0
        %v1445 = vpop.f32.mrb[0].mxu0
        %v1446 = vadd.f32 0.0, %v1445
        %v1447 = vpop.f32.mrb[0].mxu0
        %1448 = vdwg.mxu0
        %1449 = vmatprep.subr.bf16.mxu0 0
        %1450 = vmatpush1.bf16.msra.mxu0 %v1025
        %1451 = vmatprep.subr.bf16.mxu0 0
        %1452 = vmatpush1.bf16.msra.mxu0 %v1026
        %1453 = vmatprep.subr.bf16.mxu0 0
        %1454 = vmatpush1.bf16.msra.mxu0 %v1027
        %1455 = vmatprep.subr.bf16.mxu0 0
        %1456 = vmatpush1.bf16.msra.mxu0 %v1028
        %1457 = vmatprep.subr.bf16.mxu0 0
        %1458 = vmatpush1.bf16.msra.mxu0 %v1029
        %1459 = vmatprep.subr.bf16.mxu0 0
        %1460 = vmatpush1.bf16.msra.mxu0 %v1030
        %1461 = vmatprep.subr.bf16.mxu0 0
        %1462 = vmatpush1.bf16.msra.mxu0 %v1031
        %1463 = vmatprep.subr.bf16.mxu0 0
        %1464 = vmatpush1.bf16.msra.mxu0 %v1158
        %1465 = vmatprep.subr.bf16.mxu0 0
        %1466 = vmatpush1.bf16.msra.mxu0 0
        %1467 = vmatprep.subr.bf16.mxu0 0
        %1468 = vmatpush1.bf16.msra.mxu0 0
        %1469 = vmatprep.subr.bf16.mxu0 0
        %1470 = vmatpush1.bf16.msra.mxu0 0
        %1471 = vmatprep.subr.bf16.mxu0 0
        %1472 = vmatpush1.bf16.msra.mxu0 0
        %1473 = vmatprep.subr.bf16.mxu0 0
        %1474 = vmatpush1.bf16.msra.mxu0 0
        %1475 = vmatprep.subr.bf16.mxu0 0
        %1476 = vmatpush1.bf16.msra.mxu0 0
        %1477 = vmatprep.subr.bf16.mxu0 0
        %1478 = vmatpush1.bf16.msra.mxu0 0
        %1479 = vmatprep.subr.bf16.mxu0 0
        %1480 = vmatpush1.bf16.msra.mxu0 0
        %1481 = vmatprep.mubr.bf16.mxu0 0
        %1482 = vmatmul.mubr.bf16.gmra.mrb[0].mxu0 %v1058
        %v1483 = vpop.f32.mrb[0].mxu0
        %v1484 = vadd.f32 %v1195, %v1483
        %v1485 = vpop.f32.mrb[0].mxu0
        %v1486 = vpop.f32.mrb[0].mxu0
        %v1487 = vadd.f32 %v1198, %v1486
        %v1488 = vpop.f32.mrb[0].mxu0
        %1489 = vmatprep.mubr.bf16.mxu0 0
        %1490 = vmatmul.mubr.bf16.gmra.mrb[0].mxu0 %v1061
        %v1491 = vpop.f32.mrb[0].mxu0
        %v1492 = vadd.f32 %v1203, %v1491
        %v1493 = vpop.f32.mrb[0].mxu0
        %v1494 = vpop.f32.mrb[0].mxu0
        %v1495 = vadd.f32 %v1206, %v1494
        %v1496 = vpop.f32.mrb[0].mxu0
        %1497 = vmatprep.mubr.bf16.mxu0 0
        %1498 = vmatmul.mubr.bf16.gmra.mrb[0].mxu0 %v1064
        %v1499 = vpop.f32.mrb[0].mxu0
        %v1500 = vadd.f32 %v1211, %v1499
        %v1501 = vpop.f32.mrb[0].mxu0
        %v1502 = vpop.f32.mrb[0].mxu0
        %v1503 = vadd.f32 %v1214, %v1502
        %v1504 = vpop.f32.mrb[0].mxu0
        %1505 = vmatprep.mubr.bf16.mxu0 0
        %1506 = vmatmul.mubr.bf16.gmra.mrb[0].mxu0 %v1067
        %v1507 = vpop.f32.mrb[0].mxu0
        %v1508 = vadd.f32 %v1219, %v1507
        %v1509 = vpop.f32.mrb[0].mxu0
        %v1510 = vpop.f32.mrb[0].mxu0
        %v1511 = vadd.f32 %v1222, %v1510
        %v1512 = vpop.f32.mrb[0].mxu0
        %1513 = vmatprep.mubr.bf16.mxu0 0
        %1514 = vmatmul.mubr.bf16.gmra.mrb[0].mxu0 %v1070
        %v1515 = vpop.f32.mrb[0].mxu0
        %v1516 = vadd.f32 %v1227, %v1515
        %v1517 = vpop.f32.mrb[0].mxu0
        %v1518 = vpop.f32.mrb[0].mxu0
        %v1519 = vadd.f32 %v1230, %v1518
        %v1520 = vpop.f32.mrb[0].mxu0
        %1521 = vmatprep.mubr.bf16.mxu0 0
        %1522 = vmatmul.mubr.bf16.gmra.mrb[0].mxu0 %v1073
        %v1523 = vpop.f32.mrb[0].mxu0
        %v1524 = vadd.f32 %v1235, %v1523
        %v1525 = vpop.f32.mrb[0].mxu0
        %v1526 = vpop.f32.mrb[0].mxu0
        %v1527 = vadd.f32 %v1238, %v1526
        %v1528 = vpop.f32.mrb[0].mxu0
        %1529 = vmatprep.mubr.bf16.mxu0 0
        %1530 = vmatmul.mubr.bf16.gmra.mrb[0].mxu0 %v1076
        %v1531 = vpop.f32.mrb[0].mxu0
        %v1532 = vadd.f32 %v1243, %v1531
        %v1533 = vpop.f32.mrb[0].mxu0
        %v1534 = vpop.f32.mrb[0].mxu0
        %v1535 = vadd.f32 %v1246, %v1534
        %v1536 = vpop.f32.mrb[0].mxu0
        %1537 = vmatprep.mubr.bf16.mxu0 0
        %1538 = vmatmul.mubr.bf16.gmra.mrb[0].mxu0 %v1079
        %v1539 = vpop.f32.mrb[0].mxu0
        %v1540 = vadd.f32 %v1251, %v1539
        %v1541 = vpop.f32.mrb[0].mxu0
        %v1542 = vpop.f32.mrb[0].mxu0
        %v1543 = vadd.f32 %v1254, %v1542
        %v1544 = vpop.f32.mrb[0].mxu0
        %1545 = vmatprep.mubr.bf16.mxu0 0
        %1546 = vmatmul.mubr.bf16.gmra.mrb[0].mxu0 %v1082
        %v1547 = vpop.f32.mrb[0].mxu0
        %v1548 = vadd.f32 %v1259, %v1547
        %v1549 = vpop.f32.mrb[0].mxu0
        %v1550 = vpop.f32.mrb[0].mxu0
        %v1551 = vadd.f32 %v1262, %v1550
        %v1552 = vpop.f32.mrb[0].mxu0
        %1553 = vmatprep.mubr.bf16.mxu0 0
        %1554 = vmatmul.mubr.bf16.gmra.mrb[0].mxu0 %v1085
        %v1555 = vpop.f32.mrb[0].mxu0
        %v1556 = vadd.f32 %v1267, %v1555
        %v1557 = vpop.f32.mrb[0].mxu0
        %v1558 = vpop.f32.mrb[0].mxu0
        %v1559 = vadd.f32 %v1270, %v1558
        %v1560 = vpop.f32.mrb[0].mxu0
        %1561 = vmatprep.mubr.bf16.mxu0 0
        %1562 = vmatmul.mubr.bf16.gmra.mrb[0].mxu0 %v1088
        %v1563 = vpop.f32.mrb[0].mxu0
        %v1564 = vadd.f32 %v1275, %v1563
        %v1565 = vpop.f32.mrb[0].mxu0
        %v1566 = vpop.f32.mrb[0].mxu0
        %v1567 = vadd.f32 %v1278, %v1566
        %v1568 = vpop.f32.mrb[0].mxu0
        %1569 = vmatprep.mubr.bf16.mxu0 0
        %1570 = vmatmul.mubr.bf16.gmra.mrb[0].mxu0 %v1091
        %v1571 = vpop.f32.mrb[0].mxu0
        %v1572 = vadd.f32 %v1283, %v1571
        %v1573 = vpop.f32.mrb[0].mxu0
        %v1574 = vpop.f32.mrb[0].mxu0
        %v1575 = vadd.f32 %v1286, %v1574
        %v1576 = vpop.f32.mrb[0].mxu0
        %1577 = vmatprep.mubr.bf16.mxu0 0
        %1578 = vmatmul.mubr.bf16.gmra.mrb[0].mxu0 %v1094
        %v1579 = vpop.f32.mrb[0].mxu0
        %v1580 = vadd.f32 %v1291, %v1579
        %v1581 = vpop.f32.mrb[0].mxu0
        %v1582 = vpop.f32.mrb[0].mxu0
        %v1583 = vadd.f32 %v1294, %v1582
        %v1584 = vpop.f32.mrb[0].mxu0
        %1585 = vmatprep.mubr.bf16.mxu0 0
        %1586 = vmatmul.mubr.bf16.gmra.mrb[0].mxu0 %v1097
        %v1587 = vpop.f32.mrb[0].mxu0
        %v1588 = vadd.f32 %v1299, %v1587
        %v1589 = vpop.f32.mrb[0].mxu0
        %v1590 = vpop.f32.mrb[0].mxu0
        %v1591 = vadd.f32 %v1302, %v1590
        %v1592 = vpop.f32.mrb[0].mxu0
        %1593 = vmatprep.mubr.bf16.mxu0 0
        %1594 = vmatmul.mubr.bf16.gmra.mrb[0].mxu0 %v1100
        %v1595 = vpop.f32.mrb[0].mxu0
        %v1596 = vadd.f32 %v1307, %v1595
        %v1597 = vpop.f32.mrb[0].mxu0
        %v1598 = vpop.f32.mrb[0].mxu0
        %v1599 = vadd.f32 %v1310, %v1598
        %v1600 = vpop.f32.mrb[0].mxu0
        %1601 = vmatprep.mubr.bf16.mxu0 0
        %1602 = vmatmul.mubr.bf16.gmra.mrb[0].mxu0 %v1103
        %v1603 = vpop.f32.mrb[0].mxu0
        %v1604 = vadd.f32 %v1315, %v1603
        %v1605 = vpop.f32.mrb[0].mxu0
        %v1606 = vpop.f32.mrb[0].mxu0
        %v1607 = vadd.f32 %v1318, %v1606
        %v1608 = vpop.f32.mrb[0].mxu0
        %1609 = vmatprep.mubr.bf16.mxu0 0
        %1610 = vmatmul.mubr.bf16.gmra.mrb[0].mxu0 %v1106
        %v1611 = vpop.f32.mrb[0].mxu0
        %v1612 = vadd.f32 %v1323, %v1611
        %v1613 = vpop.f32.mrb[0].mxu0
        %v1614 = vpop.f32.mrb[0].mxu0
        %v1615 = vadd.f32 %v1326, %v1614
        %v1616 = vpop.f32.mrb[0].mxu0
        %1617 = vmatprep.mubr.bf16.mxu0 0
        %1618 = vmatmul.mubr.bf16.gmra.mrb[0].mxu0 %v1109
        %v1619 = vpop.f32.mrb[0].mxu0
        %v1620 = vadd.f32 %v1331, %v1619
        %v1621 = vpop.f32.mrb[0].mxu0
        %v1622 = vpop.f32.mrb[0].mxu0
        %v1623 = vadd.f32 %v1334, %v1622
        %v1624 = vpop.f32.mrb[0].mxu0
        %1625 = vmatprep.mubr.bf16.mxu0 0
        %1626 = vmatmul.mubr.bf16.gmra.mrb[0].mxu0 %v1112
        %v1627 = vpop.f32.mrb[0].mxu0
        %v1628 = vadd.f32 %v1339, %v1627
        %v1629 = vpop.f32.mrb[0].mxu0
        %v1630 = vpop.f32.mrb[0].mxu0
        %v1631 = vadd.f32 %v1342, %v1630
        %v1632 = vpop.f32.mrb[0].mxu0
        %1633 = vmatprep.mubr.bf16.mxu0 0
        %1634 = vmatmul.mubr.bf16.gmra.mrb[0].mxu0 %v1115
        %v1635 = vpop.f32.mrb[0].mxu0
        %v1636 = vadd.f32 %v1347, %v1635
        %v1637 = vpop.f32.mrb[0].mxu0
        %v1638 = vpop.f32.mrb[0].mxu0
        %v1639 = vadd.f32 %v1350, %v1638
        %v1640 = vpop.f32.mrb[0].mxu0
        %1641 = vmatprep.mubr.bf16.mxu0 0
        %1642 = vmatmul.mubr.bf16.gmra.mrb[0].mxu0 %v1118
        %v1643 = vpop.f32.mrb[0].mxu0
        %v1644 = vadd.f32 %v1355, %v1643
        %v1645 = vpop.f32.mrb[0].mxu0
        %v1646 = vpop.f32.mrb[0].mxu0
        %v1647 = vadd.f32 %v1358, %v1646
        %v1648 = vpop.f32.mrb[0].mxu0
        %1649 = vmatprep.mubr.bf16.mxu0 0
        %1650 = vmatmul.mubr.bf16.gmra.mrb[0].mxu0 %v1121
        %v1651 = vpop.f32.mrb[0].mxu0
        %v1652 = vadd.f32 %v1363, %v1651
        %v1653 = vpop.f32.mrb[0].mxu0
        %v1654 = vpop.f32.mrb[0].mxu0
        %v1655 = vadd.f32 %v1366, %v1654
        %v1656 = vpop.f32.mrb[0].mxu0
        %1657 = vmatprep.mubr.bf16.mxu0 0
        %1658 = vmatmul.mubr.bf16.gmra.mrb[0].mxu0 %v1124
        %v1659 = vpop.f32.mrb[0].mxu0
        %v1660 = vadd.f32 %v1371, %v1659
        %v1661 = vpop.f32.mrb[0].mxu0
        %v1662 = vpop.f32.mrb[0].mxu0
        %v1663 = vadd.f32 %v1374, %v1662
        %v1664 = vpop.f32.mrb[0].mxu0
        %1665 = vmatprep.mubr.bf16.mxu0 0
        %1666 = vmatmul.mubr.bf16.gmra.mrb[0].mxu0 %v1127
        %v1667 = vpop.f32.mrb[0].mxu0
        %v1668 = vadd.f32 %v1379, %v1667
        %v1669 = vpop.f32.mrb[0].mxu0
        %v1670 = vpop.f32.mrb[0].mxu0
        %v1671 = vadd.f32 %v1382, %v1670
        %v1672 = vpop.f32.mrb[0].mxu0
        %1673 = vmatprep.mubr.bf16.mxu0 0
        %1674 = vmatmul.mubr.bf16.gmra.mrb[0].mxu0 %v1130
        %v1675 = vpop.f32.mrb[0].mxu0
        %v1676 = vadd.f32 %v1387, %v1675
        %v1677 = vpop.f32.mrb[0].mxu0
        %v1678 = vpop.f32.mrb[0].mxu0
        %v1679 = vadd.f32 %v1390, %v1678
        %v1680 = vpop.f32.mrb[0].mxu0
        %1681 = vmatprep.mubr.bf16.mxu0 0
        %1682 = vmatmul.mubr.bf16.gmra.mrb[0].mxu0 %v1133
        %v1683 = vpop.f32.mrb[0].mxu0
        %v1684 = vadd.f32 %v1395, %v1683
        %v1685 = vpop.f32.mrb[0].mxu0
        %v1686 = vpop.f32.mrb[0].mxu0
        %v1687 = vadd.f32 %v1398, %v1686
        %v1688 = vpop.f32.mrb[0].mxu0
        %1689 = vmatprep.mubr.bf16.mxu0 0
        %1690 = vmatmul.mubr.bf16.gmra.mrb[0].mxu0 %v1136
        %v1691 = vpop.f32.mrb[0].mxu0
        %v1692 = vadd.f32 %v1403, %v1691
        %v1693 = vpop.f32.mrb[0].mxu0
        %v1694 = vpop.f32.mrb[0].mxu0
        %v1695 = vadd.f32 %v1406, %v1694
        %v1696 = vpop.f32.mrb[0].mxu0
        %1697 = vmatprep.mubr.bf16.mxu0 0
        %1698 = vmatmul.mubr.bf16.gmra.mrb[0].mxu0 %v1139
        %v1699 = vpop.f32.mrb[0].mxu0
        %v1700 = vadd.f32 %v1411, %v1699
        %v1701 = vpop.f32.mrb[0].mxu0
        %v1702 = vpop.f32.mrb[0].mxu0
        %v1703 = vadd.f32 %v1414, %v1702
        %v1704 = vpop.f32.mrb[0].mxu0
        %1705 = vmatprep.mubr.bf16.mxu0 0
        %1706 = vmatmul.mubr.bf16.gmra.mrb[0].mxu0 %v1142
        %v1707 = vpop.f32.mrb[0].mxu0
        %v1708 = vadd.f32 %v1419, %v1707
        %v1709 = vpop.f32.mrb[0].mxu0
        %v1710 = vpop.f32.mrb[0].mxu0
        %v1711 = vadd.f32 %v1422, %v1710
        %v1712 = vpop.f32.mrb[0].mxu0
        %1713 = vmatprep.mubr.bf16.mxu0 0
        %1714 = vmatmul.mubr.bf16.gmra.mrb[0].mxu0 %v1145
        %v1715 = vpop.f32.mrb[0].mxu0
        %v1716 = vadd.f32 %v1427, %v1715
        %v1717 = vpop.f32.mrb[0].mxu0
        %v1718 = vpop.f32.mrb[0].mxu0
        %v1719 = vadd.f32 %v1430, %v1718
        %v1720 = vpop.f32.mrb[0].mxu0
        %1721 = vmatprep.mubr.bf16.mxu0 0
        %1722 = vmatmul.mubr.bf16.gmra.mrb[0].mxu0 %v1148
        %v1723 = vpop.f32.mrb[0].mxu0
        %v1724 = vadd.f32 %v1435, %v1723
        %v1725 = vpop.f32.mrb[0].mxu0
        %v1726 = vpop.f32.mrb[0].mxu0
        %v1727 = vadd.f32 %v1438, %v1726
        %v1728 = vpop.f32.mrb[0].mxu0
        %1729 = vmatprep.mubr.bf16.mxu0 0
        %1730 = vmatmul.mubr.bf16.gmra.mrb[0].mxu0 %v1151
        %v1731 = vpop.f32.mrb[0].mxu0
        %v1732 = vadd.f32 %v1443, %v1731
        %v1733 = vpop.f32.mrb[0].mxu0
        %v1734 = vpop.f32.mrb[0].mxu0
        %v1735 = vadd.f32 %v1446, %v1734
        %v1736 = vpop.f32.mrb[0].mxu0
        %1737 = vdwg.mxu0
        %v1738 = vld [vmem:[#allocation7] sm:$0x1]
        %v1740 = vlaneseq
        %v1741 = vshrl.u32 %v1740, 7
        %v1742 = vsub.s32 0, %v1741
        %v1743 = vrot.slane %v1738, %v1742
        %v1745 = vmul.f32 %v1484, %v1743
        %v1746 = vmul.f32 %v1487, %v1743
        %v1747 = vmul.f32 %v1492, %v1743
        %v1748 = vmul.f32 %v1495, %v1743
        %v1749 = vmul.f32 %v1500, %v1743
        %v1750 = vmul.f32 %v1503, %v1743
        %v1751 = vmul.f32 %v1508, %v1743
        %v1752 = vmul.f32 %v1511, %v1743
        %v1753 = vmul.f32 %v1516, %v1743
        %v1754 = vmul.f32 %v1519, %v1743
        %v1755 = vmul.f32 %v1524, %v1743
        %v1756 = vmul.f32 %v1527, %v1743
        %v1757 = vmul.f32 %v1532, %v1743
        %v1758 = vmul.f32 %v1535, %v1743
        %v1759 = vmul.f32 %v1540, %v1743
        %v1760 = vmul.f32 %v1543, %v1743
        %v1761 = vmul.f32 %v1548, %v1743
        %v1762 = vmul.f32 %v1551, %v1743
        %v1763 = vmul.f32 %v1556, %v1743
        %v1764 = vmul.f32 %v1559, %v1743
        %v1765 = vmul.f32 %v1564, %v1743
        %v1766 = vmul.f32 %v1567, %v1743
        %v1767 = vmul.f32 %v1572, %v1743
        %v1768 = vmul.f32 %v1575, %v1743
        %v1769 = vmul.f32 %v1580, %v1743
        %v1770 = vmul.f32 %v1583, %v1743
        %v1771 = vmul.f32 %v1588, %v1743
        %v1772 = vmul.f32 %v1591, %v1743
        %v1773 = vmul.f32 %v1596, %v1743
        %v1774 = vmul.f32 %v1599, %v1743
        %v1775 = vmul.f32 %v1604, %v1743
        %v1776 = vmul.f32 %v1607, %v1743
        %v1777 = vmul.f32 %v1612, %v1743
        %v1778 = vmul.f32 %v1615, %v1743
        %v1779 = vmul.f32 %v1620, %v1743
        %v1780 = vmul.f32 %v1623, %v1743
        %v1781 = vmul.f32 %v1628, %v1743
        %v1782 = vmul.f32 %v1631, %v1743
        %v1783 = vmul.f32 %v1636, %v1743
        %v1784 = vmul.f32 %v1639, %v1743
        %v1785 = vmul.f32 %v1644, %v1743
        %v1786 = vmul.f32 %v1647, %v1743
        %v1787 = vmul.f32 %v1652, %v1743
        %v1788 = vmul.f32 %v1655, %v1743
        %v1789 = vmul.f32 %v1660, %v1743
        %v1790 = vmul.f32 %v1663, %v1743
        %v1791 = vmul.f32 %v1668, %v1743
        %v1792 = vmul.f32 %v1671, %v1743
        %v1793 = vmul.f32 %v1676, %v1743
        %v1794 = vmul.f32 %v1679, %v1743
        %v1795 = vmul.f32 %v1684, %v1743
        %v1796 = vmul.f32 %v1687, %v1743
        %v1797 = vmul.f32 %v1692, %v1743
        %v1798 = vmul.f32 %v1695, %v1743
        %v1799 = vmul.f32 %v1700, %v1743
        %v1800 = vmul.f32 %v1703, %v1743
        %v1801 = vmul.f32 %v1708, %v1743
        %v1802 = vmul.f32 %v1711, %v1743
        %v1803 = vmul.f32 %v1716, %v1743
        %v1804 = vmul.f32 %v1719, %v1743
        %v1805 = vmul.f32 %v1724, %v1743
        %v1806 = vmul.f32 %v1727, %v1743
        %v1807 = vmul.f32 %v1732, %v1743
        %v1808 = vmul.f32 %v1735, %v1743
        %v1809 = vld [vmem:[#allocation8] sm:$0x1]
        %v1811 = vlaneseq
        %v1812 = vshrl.u32 %v1811, 7
        %v1813 = vsub.s32 0, %v1812
        %v1814 = vrot.slane %v1809, %v1813
        %v1816 = vadd.f32 %v1745, %v1814
        %v1817 = vadd.f32 %v1746, %v1814
        %v1818 = vadd.f32 %v1747, %v1814
        %v1819 = vadd.f32 %v1748, %v1814
        %v1820 = vadd.f32 %v1749, %v1814
        %v1821 = vadd.f32 %v1750, %v1814
        %v1822 = vadd.f32 %v1751, %v1814
        %v1823 = vadd.f32 %v1752, %v1814
        %v1824 = vadd.f32 %v1753, %v1814
        %v1825 = vadd.f32 %v1754, %v1814
        %v1826 = vadd.f32 %v1755, %v1814
        %v1827 = vadd.f32 %v1756, %v1814
        %v1828 = vadd.f32 %v1757, %v1814
        %v1829 = vadd.f32 %v1758, %v1814
        %v1830 = vadd.f32 %v1759, %v1814
        %v1831 = vadd.f32 %v1760, %v1814
        %v1832 = vadd.f32 %v1761, %v1814
        %v1833 = vadd.f32 %v1762, %v1814
        %v1834 = vadd.f32 %v1763, %v1814
        %v1835 = vadd.f32 %v1764, %v1814
        %v1836 = vadd.f32 %v1765, %v1814
        %v1837 = vadd.f32 %v1766, %v1814
        %v1838 = vadd.f32 %v1767, %v1814
        %v1839 = vadd.f32 %v1768, %v1814
        %v1840 = vadd.f32 %v1769, %v1814
        %v1841 = vadd.f32 %v1770, %v1814
        %v1842 = vadd.f32 %v1771, %v1814
        %v1843 = vadd.f32 %v1772, %v1814
        %v1844 = vadd.f32 %v1773, %v1814
        %v1845 = vadd.f32 %v1774, %v1814
        %v1846 = vadd.f32 %v1775, %v1814
        %v1847 = vadd.f32 %v1776, %v1814
        %v1848 = vadd.f32 %v1777, %v1814
        %v1849 = vadd.f32 %v1778, %v1814
        %v1850 = vadd.f32 %v1779, %v1814
        %v1851 = vadd.f32 %v1780, %v1814
        %v1852 = vadd.f32 %v1781, %v1814
        %v1853 = vadd.f32 %v1782, %v1814
        %v1854 = vadd.f32 %v1783, %v1814
        %v1855 = vadd.f32 %v1784, %v1814
        %v1856 = vadd.f32 %v1785, %v1814
        %v1857 = vadd.f32 %v1786, %v1814
        %v1858 = vadd.f32 %v1787, %v1814
        %v1859 = vadd.f32 %v1788, %v1814
        %v1860 = vadd.f32 %v1789, %v1814
        %v1861 = vadd.f32 %v1790, %v1814
        %v1862 = vadd.f32 %v1791, %v1814
        %v1863 = vadd.f32 %v1792, %v1814
        %v1864 = vadd.f32 %v1793, %v1814
        %v1865 = vadd.f32 %v1794, %v1814
        %v1866 = vadd.f32 %v1795, %v1814
        %v1867 = vadd.f32 %v1796, %v1814
        %v1868 = vadd.f32 %v1797, %v1814
        %v1869 = vadd.f32 %v1798, %v1814
        %v1870 = vadd.f32 %v1799, %v1814
        %v1871 = vadd.f32 %v1800, %v1814
        %v1872 = vadd.f32 %v1801, %v1814
        %v1873 = vadd.f32 %v1802, %v1814
        %v1874 = vadd.f32 %v1803, %v1814
        %v1875 = vadd.f32 %v1804, %v1814
        %v1876 = vadd.f32 %v1805, %v1814
        %v1877 = vadd.f32 %v1806, %v1814
        %v1878 = vadd.f32 %v1807, %v1814
        %v1879 = vadd.f32 %v1808, %v1814
        %v1880 = vmax.f32 %v1816, 0.0
        %v1881 = vmax.f32 %v1817, 0.0
        %v1882 = vmax.f32 %v1818, 0.0
        %v1883 = vmax.f32 %v1819, 0.0
        %v1884 = vmax.f32 %v1820, 0.0
        %v1885 = vmax.f32 %v1821, 0.0
        %v1886 = vmax.f32 %v1822, 0.0
        %v1887 = vmax.f32 %v1823, 0.0
        %v1888 = vmax.f32 %v1824, 0.0
        %v1889 = vmax.f32 %v1825, 0.0
        %v1890 = vmax.f32 %v1826, 0.0
        %v1891 = vmax.f32 %v1827, 0.0
        %v1892 = vmax.f32 %v1828, 0.0
        %v1893 = vmax.f32 %v1829, 0.0
        %v1894 = vmax.f32 %v1830, 0.0
        %v1895 = vmax.f32 %v1831, 0.0
        %v1896 = vmax.f32 %v1832, 0.0
        %v1897 = vmax.f32 %v1833, 0.0
        %v1898 = vmax.f32 %v1834, 0.0
        %v1899 = vmax.f32 %v1835, 0.0
        %v1900 = vmax.f32 %v1836, 0.0
        %v1901 = vmax.f32 %v1837, 0.0
        %v1902 = vmax.f32 %v1838, 0.0
        %v1903 = vmax.f32 %v1839, 0.0
        %v1904 = vmax.f32 %v1840, 0.0
        %v1905 = vmax.f32 %v1841, 0.0
        %v1906 = vmax.f32 %v1842, 0.0
        %v1907 = vmax.f32 %v1843, 0.0
        %v1908 = vmax.f32 %v1844, 0.0
        %v1909 = vmax.f32 %v1845, 0.0
        %v1910 = vmax.f32 %v1846, 0.0
        %v1911 = vmax.f32 %v1847, 0.0
        %v1912 = vmax.f32 %v1848, 0.0
        %v1913 = vmax.f32 %v1849, 0.0
        %v1914 = vmax.f32 %v1850, 0.0
        %v1915 = vmax.f32 %v1851, 0.0
        %v1916 = vmax.f32 %v1852, 0.0
        %v1917 = vmax.f32 %v1853, 0.0
        %v1918 = vmax.f32 %v1854, 0.0
        %v1919 = vmax.f32 %v1855, 0.0
        %v1920 = vmax.f32 %v1856, 0.0
        %v1921 = vmax.f32 %v1857, 0.0
        %v1922 = vmax.f32 %v1858, 0.0
        %v1923 = vmax.f32 %v1859, 0.0
        %v1924 = vmax.f32 %v1860, 0.0
        %v1925 = vmax.f32 %v1861, 0.0
        %v1926 = vmax.f32 %v1862, 0.0
        %v1927 = vmax.f32 %v1863, 0.0
        %v1928 = vmax.f32 %v1864, 0.0
        %v1929 = vmax.f32 %v1865, 0.0
        %v1930 = vmax.f32 %v1866, 0.0
        %v1931 = vmax.f32 %v1867, 0.0
        %v1932 = vmax.f32 %v1868, 0.0
        %v1933 = vmax.f32 %v1869, 0.0
        %v1934 = vmax.f32 %v1870, 0.0
        %v1935 = vmax.f32 %v1871, 0.0
        %v1936 = vmax.f32 %v1872, 0.0
        %v1937 = vmax.f32 %v1873, 0.0
        %v1938 = vmax.f32 %v1874, 0.0
        %v1939 = vmax.f32 %v1875, 0.0
        %v1940 = vmax.f32 %v1876, 0.0
        %v1941 = vmax.f32 %v1877, 0.0
        %v1942 = vmax.f32 %v1878, 0.0
        %v1943 = vmax.f32 %v1879, 0.0
        %v1944 = vpack.c.bf16 %v1881, %v1880
        %v1945 = vpack.c.bf16 %v1883, %v1882
        %v1946 = vpack.c.bf16 %v1885, %v1884
        %v1947 = vpack.c.bf16 %v1887, %v1886
        %v1948 = vpack.c.bf16 %v1889, %v1888
        %v1949 = vpack.c.bf16 %v1891, %v1890
        %v1950 = vpack.c.bf16 %v1893, %v1892
        %v1951 = vpack.c.bf16 %v1895, %v1894
        %v1952 = vpack.c.bf16 %v1897, %v1896
        %v1953 = vpack.c.bf16 %v1899, %v1898
        %v1954 = vpack.c.bf16 %v1901, %v1900
        %v1955 = vpack.c.bf16 %v1903, %v1902
        %v1956 = vpack.c.bf16 %v1905, %v1904
        %v1957 = vpack.c.bf16 %v1907, %v1906
        %v1958 = vpack.c.bf16 %v1909, %v1908
        %v1959 = vpack.c.bf16 %v1911, %v1910
        %v1960 = vpack.c.bf16 %v1913, %v1912
        %v1961 = vpack.c.bf16 %v1915, %v1914
        %v1962 = vpack.c.bf16 %v1917, %v1916
        %v1963 = vpack.c.bf16 %v1919, %v1918
        %v1964 = vpack.c.bf16 %v1921, %v1920
        %v1965 = vpack.c.bf16 %v1923, %v1922
        %v1966 = vpack.c.bf16 %v1925, %v1924
        %v1967 = vpack.c.bf16 %v1927, %v1926
        %v1968 = vpack.c.bf16 %v1929, %v1928
        %v1969 = vpack.c.bf16 %v1931, %v1930
        %v1970 = vpack.c.bf16 %v1933, %v1932
        %v1971 = vpack.c.bf16 %v1935, %v1934
        %v1972 = vpack.c.bf16 %v1937, %v1936
        %v1973 = vpack.c.bf16 %v1939, %v1938
        %v1974 = vpack.c.bf16 %v1941, %v1940
        %v1975 = vpack.c.bf16 %v1943, %v1942
        %v2008 = vunpack.c.l.b16 %v1944
        %v2009 = vunpack.c.h.b16 %v1944
        %v2010 = vunpack.c.l.b16 %v1945
        %v2011 = vunpack.c.h.b16 %v1945
        %v2012 = vunpack.c.l.b16 %v1946
        %v2013 = vunpack.c.h.b16 %v1946
        %v2014 = vunpack.c.l.b16 %v1947
        %v2015 = vunpack.c.h.b16 %v1947
        %v2016 = vunpack.c.l.b16 %v1948
        %v2017 = vunpack.c.h.b16 %v1948
        %v2018 = vunpack.c.l.b16 %v1949
        %v2019 = vunpack.c.h.b16 %v1949
        %v2020 = vunpack.c.l.b16 %v1950
        %v2021 = vunpack.c.h.b16 %v1950
        %v2022 = vunpack.c.l.b16 %v1951
        %v2023 = vunpack.c.h.b16 %v1951
        %v2024 = vunpack.c.l.b16 %v1952
        %v2025 = vunpack.c.h.b16 %v1952
        %v2026 = vunpack.c.l.b16 %v1953
        %v2027 = vunpack.c.h.b16 %v1953
        %v2028 = vunpack.c.l.b16 %v1954
        %v2029 = vunpack.c.h.b16 %v1954
        %v2030 = vunpack.c.l.b16 %v1955
        %v2031 = vunpack.c.h.b16 %v1955
        %v2032 = vunpack.c.l.b16 %v1956
        %v2033 = vunpack.c.h.b16 %v1956
        %v2034 = vunpack.c.l.b16 %v1957
        %v2035 = vunpack.c.h.b16 %v1957
        %v2036 = vunpack.c.l.b16 %v1958
        %v2037 = vunpack.c.h.b16 %v1958
        %v2038 = vunpack.c.l.b16 %v1959
        %v2039 = vunpack.c.h.b16 %v1959
        %v2040 = vunpack.c.l.b16 %v1960
        %v2041 = vunpack.c.h.b16 %v1960
        %v2042 = vunpack.c.l.b16 %v1961
        %v2043 = vunpack.c.h.b16 %v1961
        %v2044 = vunpack.c.l.b16 %v1962
        %v2045 = vunpack.c.h.b16 %v1962
        %v2046 = vunpack.c.l.b16 %v1963
        %v2047 = vunpack.c.h.b16 %v1963
        %v2048 = vunpack.c.l.b16 %v1964
        %v2049 = vunpack.c.h.b16 %v1964
        %v2050 = vunpack.c.l.b16 %v1965
        %v2051 = vunpack.c.h.b16 %v1965
        %v2052 = vunpack.c.l.b16 %v1966
        %v2053 = vunpack.c.h.b16 %v1966
        %v2054 = vunpack.c.l.b16 %v1967
        %v2055 = vunpack.c.h.b16 %v1967
        %v2056 = vunpack.c.l.b16 %v1968
        %v2057 = vunpack.c.h.b16 %v1968
        %v2058 = vunpack.c.l.b16 %v1969
        %v2059 = vunpack.c.h.b16 %v1969
        %v2060 = vunpack.c.l.b16 %v1970
        %v2061 = vunpack.c.h.b16 %v1970
        %v2062 = vunpack.c.l.b16 %v1971
        %v2063 = vunpack.c.h.b16 %v1971
        %v2064 = vunpack.c.l.b16 %v1972
        %v2065 = vunpack.c.h.b16 %v1972
        %v2066 = vunpack.c.l.b16 %v1973
        %v2067 = vunpack.c.h.b16 %v1973
        %v2068 = vunpack.c.l.b16 %v1974
        %v2069 = vunpack.c.h.b16 %v1974
        %v2070 = vunpack.c.l.b16 %v1975
        %v2071 = vunpack.c.h.b16 %v1975
        %v2072 = vpack.c.b16 %v2008, %v2008
        %v2073 = vpack.c.b16 %v2009, %v2009
        %v2074 = vpack.c.b16 %v2010, %v2010
        %v2075 = vpack.c.b16 %v2011, %v2011
        %v2076 = vpack.c.b16 %v2012, %v2012
        %v2077 = vpack.c.b16 %v2013, %v2013
        %v2078 = vpack.c.b16 %v2014, %v2014
        %v2079 = vpack.c.b16 %v2015, %v2015
        %v2080 = vpack.c.b16 %v2016, %v2016
        %v2081 = vpack.c.b16 %v2017, %v2017
        %v2082 = vpack.c.b16 %v2018, %v2018
        %v2083 = vpack.c.b16 %v2019, %v2019
        %v2084 = vpack.c.b16 %v2020, %v2020
        %v2085 = vpack.c.b16 %v2021, %v2021
        %v2086 = vpack.c.b16 %v2022, %v2022
        %v2087 = vpack.c.b16 %v2023, %v2023
        %v2088 = vpack.c.b16 %v2024, %v2024
        %v2089 = vpack.c.b16 %v2025, %v2025
        %v2090 = vpack.c.b16 %v2026, %v2026
        %v2091 = vpack.c.b16 %v2027, %v2027
        %v2092 = vpack.c.b16 %v2028, %v2028
        %v2093 = vpack.c.b16 %v2029, %v2029
        %v2094 = vpack.c.b16 %v2030, %v2030
        %v2095 = vpack.c.b16 %v2031, %v2031
        %v2096 = vpack.c.b16 %v2032, %v2032
        %v2097 = vpack.c.b16 %v2033, %v2033
        %v2098 = vpack.c.b16 %v2034, %v2034
        %v2099 = vpack.c.b16 %v2035, %v2035
        %v2100 = vpack.c.b16 %v2036, %v2036
        %v2101 = vpack.c.b16 %v2037, %v2037
        %v2102 = vpack.c.b16 %v2038, %v2038
        %v2103 = vpack.c.b16 %v2039, %v2039
        %v2104 = vpack.c.b16 %v2040, %v2040
        %v2105 = vpack.c.b16 %v2041, %v2041
        %v2106 = vpack.c.b16 %v2042, %v2042
        %v2107 = vpack.c.b16 %v2043, %v2043
        %v2108 = vpack.c.b16 %v2044, %v2044
        %v2109 = vpack.c.b16 %v2045, %v2045
        %v2110 = vpack.c.b16 %v2046, %v2046
        %v2111 = vpack.c.b16 %v2047, %v2047
        %v2112 = vpack.c.b16 %v2048, %v2048
        %v2113 = vpack.c.b16 %v2049, %v2049
        %v2114 = vpack.c.b16 %v2050, %v2050
        %v2115 = vpack.c.b16 %v2051, %v2051
        %v2116 = vpack.c.b16 %v2052, %v2052
        %v2117 = vpack.c.b16 %v2053, %v2053
        %v2118 = vpack.c.b16 %v2054, %v2054
        %v2119 = vpack.c.b16 %v2055, %v2055
        %v2120 = vpack.c.b16 %v2056, %v2056
        %v2121 = vpack.c.b16 %v2057, %v2057
        %v2122 = vpack.c.b16 %v2058, %v2058
        %v2123 = vpack.c.b16 %v2059, %v2059
        %v2124 = vpack.c.b16 %v2060, %v2060
        %v2125 = vpack.c.b16 %v2061, %v2061
        %v2126 = vpack.c.b16 %v2062, %v2062
        %v2127 = vpack.c.b16 %v2063, %v2063
        %v2128 = vpack.c.b16 %v2064, %v2064
        %v2129 = vpack.c.b16 %v2065, %v2065
        %v2130 = vpack.c.b16 %v2066, %v2066
        %v2131 = vpack.c.b16 %v2067, %v2067
        %v2132 = vpack.c.b16 %v2068, %v2068
        %v2133 = vpack.c.b16 %v2069, %v2069
        %v2134 = vpack.c.b16 %v2070, %v2070
        %v2135 = vpack.c.b16 %v2071, %v2071
        %vm2200 = vcmask 191488
        %2201 = vst.msk [vmem:[%s256] sm:$0xf] %vm2200, %v2072
        %2202 = vst.msk [vmem:[%s256 + $0x4] sm:$0xf] %vm2200, %v2073
        %2203 = vst.msk [vmem:[%s256 + $0x8] sm:$0xf] %vm2200, %v2074
        %2204 = vst.msk [vmem:[%s256 + $0xc] sm:$0xf] %vm2200, %v2075
        %2205 = vst.msk [vmem:[%s256 + $0x10] sm:$0xf] %vm2200, %v2076
        %2206 = vst.msk [vmem:[%s256 + $0x14] sm:$0xf] %vm2200, %v2077
        %2207 = vst.msk [vmem:[%s256 + $0x18] sm:$0xf] %vm2200, %v2078
        %2208 = vst.msk [vmem:[%s256 + $0x1c] sm:$0xf] %vm2200, %v2079
        %2209 = vst.msk [vmem:[%s256 + $0x20] sm:$0xf] %vm2200, %v2080
        %2210 = vst.msk [vmem:[%s256 + $0x24] sm:$0xf] %vm2200, %v2081
        %2211 = vst.msk [vmem:[%s256 + $0x28] sm:$0xf] %vm2200, %v2082
        %2212 = vst.msk [vmem:[%s256 + $0x2c] sm:$0xf] %vm2200, %v2083
        %2213 = vst.msk [vmem:[%s256 + $0x30] sm:$0xf] %vm2200, %v2084
        %2214 = vst.msk [vmem:[%s256 + $0x34] sm:$0xf] %vm2200, %v2085
        %2215 = vst.msk [vmem:[%s256 + $0x38] sm:$0xf] %vm2200, %v2086
        %2216 = vst.msk [vmem:[%s256 + $0x3c] sm:$0xf] %vm2200, %v2087
        %2217 = vst.msk [vmem:[%s256 + $0x40] sm:$0xf] %vm2200, %v2088
        %2218 = vst.msk [vmem:[%s256 + $0x44] sm:$0xf] %vm2200, %v2089
        %2219 = vst.msk [vmem:[%s256 + $0x48] sm:$0xf] %vm2200, %v2090
        %2220 = vst.msk [vmem:[%s256 + $0x4c] sm:$0xf] %vm2200, %v2091
        %2221 = vst.msk [vmem:[%s256 + $0x50] sm:$0xf] %vm2200, %v2092
        %2222 = vst.msk [vmem:[%s256 + $0x54] sm:$0xf] %vm2200, %v2093
        %2223 = vst.msk [vmem:[%s256 + $0x58] sm:$0xf] %vm2200, %v2094
        %2224 = vst.msk [vmem:[%s256 + $0x5c] sm:$0xf] %vm2200, %v2095
        %2225 = vst.msk [vmem:[%s256 + $0x60] sm:$0xf] %vm2200, %v2096
        %2226 = vst.msk [vmem:[%s256 + $0x64] sm:$0xf] %vm2200, %v2097
        %2227 = vst.msk [vmem:[%s256 + $0x68] sm:$0xf] %vm2200, %v2098
        %2228 = vst.msk [vmem:[%s256 + $0x6c] sm:$0xf] %vm2200, %v2099
        %2229 = vst.msk [vmem:[%s256 + $0x70] sm:$0xf] %vm2200, %v2100
        %2230 = vst.msk [vmem:[%s256 + $0x74] sm:$0xf] %vm2200, %v2101
        %2231 = vst.msk [vmem:[%s256 + $0x78] sm:$0xf] %vm2200, %v2102
        %2232 = vst.msk [vmem:[%s256 + $0x7c] sm:$0xf] %vm2200, %v2103
        %2233 = vst.msk [vmem:[%s256 + $0x80] sm:$0xf] %vm2200, %v2104
        %2234 = vst.msk [vmem:[%s256 + $0x84] sm:$0xf] %vm2200, %v2105
        %2235 = vst.msk [vmem:[%s256 + $0x88] sm:$0xf] %vm2200, %v2106
        %2236 = vst.msk [vmem:[%s256 + $0x8c] sm:$0xf] %vm2200, %v2107
        %2237 = vst.msk [vmem:[%s256 + $0x90] sm:$0xf] %vm2200, %v2108
        %2238 = vst.msk [vmem:[%s256 + $0x94] sm:$0xf] %vm2200, %v2109
        %2239 = vst.msk [vmem:[%s256 + $0x98] sm:$0xf] %vm2200, %v2110
        %2240 = vst.msk [vmem:[%s256 + $0x9c] sm:$0xf] %vm2200, %v2111
        %2241 = vst.msk [vmem:[%s256 + $0xa0] sm:$0xf] %vm2200, %v2112
        %2242 = vst.msk [vmem:[%s256 + $0xa4] sm:$0xf] %vm2200, %v2113
        %2243 = vst.msk [vmem:[%s256 + $0xa8] sm:$0xf] %vm2200, %v2114
        %2244 = vst.msk [vmem:[%s256 + $0xac] sm:$0xf] %vm2200, %v2115
        %2245 = vst.msk [vmem:[%s256 + $0xb0] sm:$0xf] %vm2200, %v2116
        %2246 = vst.msk [vmem:[%s256 + $0xb4] sm:$0xf] %vm2200, %v2117
        %2247 = vst.msk [vmem:[%s256 + $0xb8] sm:$0xf] %vm2200, %v2118
        %2248 = vst.msk [vmem:[%s256 + $0xbc] sm:$0xf] %vm2200, %v2119
        %2249 = vst.msk [vmem:[%s256 + $0xc0] sm:$0xf] %vm2200, %v2120
        %2250 = vst.msk [vmem:[%s256 + $0xc4] sm:$0xf] %vm2200, %v2121
        %2251 = vst.msk [vmem:[%s256 + $0xc8] sm:$0xf] %vm2200, %v2122
        %2252 = vst.msk [vmem:[%s256 + $0xcc] sm:$0xf] %vm2200, %v2123
        %2253 = vst.msk [vmem:[%s256 + $0xd0] sm:$0xf] %vm2200, %v2124
        %2254 = vst.msk [vmem:[%s256 + $0xd4] sm:$0xf] %vm2200, %v2125
        %2255 = vst.msk [vmem:[%s256 + $0xd8] sm:$0xf] %vm2200, %v2126
        %2256 = vst.msk [vmem:[%s256 + $0xdc] sm:$0xf] %vm2200, %v2127
        %2257 = vst.msk [vmem:[%s256 + $0xe0] sm:$0xf] %vm2200, %v2128
        %2258 = vst.msk [vmem:[%s256 + $0xe4] sm:$0xf] %vm2200, %v2129
        %2259 = vst.msk [vmem:[%s256 + $0xe8] sm:$0xf] %vm2200, %v2130
        %2260 = vst.msk [vmem:[%s256 + $0xec] sm:$0xf] %vm2200, %v2131
        %2261 = vst.msk [vmem:[%s256 + $0xf0] sm:$0xf] %vm2200, %v2132
        %2262 = vst.msk [vmem:[%s256 + $0xf4] sm:$0xf] %vm2200, %v2133
        %2263 = vst.msk [vmem:[%s256 + $0xf8] sm:$0xf] %vm2200, %v2134
        %2264 = vst.msk [vmem:[%s256 + $0xfc] sm:$0xf] %vm2200, %v2135
        %s2265 = sand.u32 %s120, 1
        %s2266 = scalar_lea.sflag [#allocation4], %s2265
        %s2267 = sand.u32 %s120, 1
        %s2268 = smul.addr %s2267, 256
        %s2269 = scalar_lea.vmem [#allocation10], %s2268
        // Predicated region
        $region53: #{tpu_custom_call.1} parent=35 // pred_check
          %p2270 = pneg %p130
        $region54: #{tpu_custom_call.1} parent=35 // pred_check_branch
          %2272 = sbr.rel (%p2270) target = $region56
        $region55: #{tpu_custom_call.1} parent=35 // pred_region
          %s2273 = smul.u32 64, %s23
          %s2275 = ssub.s32 4096, 4096
          %2276 = vsyncadd %s2266, %s2275
          %s2277 = smul.addr %s2273, 64
          %s2278 = scalar_lea.hbm %s4, %s2277
          %s2279 = sshll.u32 %s2269, 4
          %s2280 = int_to_ptr.vmem [resolvable:$true] %s2279
          %2285 = dma.vmem_to_hbm [thread:$0]  %s2280, 4096, %s2278, %s2266, 64, 64, 4
        $region56: #{tpu_custom_call.1} parent=35 // pred_fallthru
          _
      $region36: #{tpu_custom_call.1} parent=5 // pred_fallthru
        _
      %p2286 = scmp.le.s32.totalorder 2, %s18
      // Predicated region
      $region57: #{tpu_custom_call.1} parent=5 // pred_check
        %p2287 = pneg %p2286
      $region58: #{tpu_custom_call.1} parent=5 // pred_check_branch
        %2289 = sbr.rel (%p2287) target = $region60
      $region59: #{tpu_custom_call.1} parent=5 // pred_region
        %s2290 = ssub.s32 %s18, 2
        // Predicated region
        $region61: #{tpu_custom_call.1} parent=59 // pred_check
          %p2291 = pneg %p136
        $region62: #{tpu_custom_call.1} parent=59 // pred_check_branch
          %2293 = sbr.rel (%p2291) target = $region64
        $region63: #{tpu_custom_call.1} parent=59 // pred_region
          %s2294 = sand.u32 %s121, 1
          %s2295 = scalar_lea.sflag [#allocation4], %s2294
          %s2296 = sand.u32 %s121, 1
          %s2297 = smul.addr %s2296, 256
          %s2298 = scalar_lea.vmem [#allocation10], %s2297
          %2299 = dma.done %s2295, 4096
        $region64: #{tpu_custom_call.1} parent=59 // pred_fallthru
          _
      $region60: #{tpu_custom_call.1} parent=5 // pred_fallthru
        _
    $region6: #{tpu_custom_call.1} parent=1 // loop_footer
      %s22 = sadd.s32 1, %s18
    $region7: #{tpu_custom_call.1} parent=1 // loop_footer_branch
      %17 = sbr.rel target = $region3
    $region8: #{tpu_custom_call.1} parent=1 // loop_exit
      _
    %2300 = vsyncpa [#allocation3], 1
    %s2301 = scalar_lea.sflag [#allocation3], 1
    %2302 = vsyncpa %s2301, 1
    %2303 = vsyncpa [#allocation6], 1
    %2304 = vsyncpa [#allocation9], 1
    %2305 = vsyncpa [#allocation4], 1
    %s2306 = scalar_lea.sflag [#allocation4], 1
    %2307 = vsyncpa %s2306, 1

</llo_original>
